<compile_context>
chip_gen: v7x
topology: tpu7x:2x2x1
jax: 0.10.0
libtpu: 0.0.40
codegen_flags: <defaults>
</compile_context>

<pallas_src>
import numpy as np
import jax
import jax.numpy as jnp
from jax import lax
from jax.experimental import pallas as pl
from jax.experimental.pallas import tpu as pltpu


# ----------------------------------------------------------------------------
# Helpers
# ----------------------------------------------------------------------------
def _round_up(x: int, m: int) -> int:
    return ((x + m - 1) // m) * m


def _choose_tile(n: int, max_tile: int = 512, align: int = 256):
    """Pad n to a multiple of `align` and pick the largest pow2 tile <= max_tile
    that divides the padded size (never a full-extent fallback)."""
    n_pad = _round_up(max(n, 1), align)
    tile = align
    for cand in (2048, 1024, 512, 256):
        if cand <= max_tile and n_pad % cand == 0:
            tile = cand
            break
    return n_pad, tile


def build_norm_rating(num_users: int, num_items: int,
                      user_id_idxs: np.ndarray, item_id_idxs: np.ndarray) -> np.ndarray:
    """Normalized bipartite block R_norm = Du^{-1/2} R Di^{-1/2}.

    This is the only non-zero block of init_adj_matrix()'s D^{-1/2} A D^{-1/2}
    with A = [[0, R], [R^T, 0]]; the full N x N matrix is never materialized
    on device.
    """
    r = np.zeros((num_users, num_items), dtype=np.float32)
    r[user_id_idxs, item_id_idxs] = 1.0          # dok-style set (duplicates dedup)
    du = r.sum(axis=1)
    di = r.sum(axis=0)
    du_is = np.zeros_like(du)
    nz = du > 0.0
    du_is[nz] = du[nz] ** -0.5
    di_is = np.zeros_like(di)
    nz = di > 0.0
    di_is[nz] = di[nz] ** -0.5
    return (du_is[:, None] * r * di_is[None, :]).astype(np.float32)


# ----------------------------------------------------------------------------
# Pallas kernel: L propagations over the bipartite graph + layer sum.
#   grid = (layer, user_block, item_block), all sequential ("arbitrary") since
#   cur/nxt scratch and the resident layer-sum outputs carry across all axes.
# ----------------------------------------------------------------------------
def lightgcn_mean_embeddings(r_norm: jnp.ndarray, init_embed: jnp.ndarray,
                             num_users: int, num_items: int, num_layers: int,
                             *, max_tile_u: int = 512, max_tile_i: int = 1024) -> jnp.ndarray:
    """Returns mean over [E_0, ..., E_L] with E_{k+1} = A_norm @ E_k (f32)."""
    n = num_users + num_items
    d = init_embed.shape[1]
    assert init_embed.shape[0] == n
    assert r_norm.shape == (num_users, num_items)

    init_f32 = init_embed.astype(jnp.float32)
    if num_layers == 0:
        return init_f32

    nu_pad, tu = _choose_tile(num_users, max_tile_u)
    ni_pad, ti = _choose_tile(num_items, max_tile_i)
    n_mu, n_ki = nu_pad // tu, ni_pad // ti

    # bf16 MXU-native padded operands; zero rows/cols keep padded nodes inert.
    r_pad = jnp.zeros((nu_pad, ni_pad), jnp.bfloat16)
    r_pad = r_pad.at[:num_users, :num_items].set(r_norm.astype(jnp.bfloat16))
    e0_u = jnp.zeros((nu_pad, d), jnp.bfloat16).at[:num_users].set(
        init_embed[:num_users].astype(jnp.bfloat16))
    e0_i = jnp.zeros((ni_pad, d), jnp.bfloat16).at[:num_items].set(
        init_embed[num_users:num_users + num_items].astype(jnp.bfloat16))

    def kernel(e0u_hbm, e0i_hbm, r_ref, out_u_ref, out_i_ref,
               cur_u, cur_i, nxt_u, nxt_i, acc_u, dma_sem):
        layer = pl.program_id(0)
        mu = pl.program_id(1)
        ki = pl.program_id(2)
        n_mu_ = pl.num_programs(1)
        n_ki_ = pl.num_programs(2)

        # One-time init: DMA E_0 (bf16) into the running-embedding scratch and
        # zero the resident layer-sum accumulators.
        @pl.when((layer == 0) & (mu == 0) & (ki == 0))
        def _init():
            cp = pltpu.make_async_copy(e0u_hbm, cur_u, dma_sem)
            cp.start()
            cp.wait()
            cp = pltpu.make_async_copy(e0i_hbm, cur_i, dma_sem)
            cp.start()
            cp.wait()
            out_u_ref[...] = jnp.zeros_like(out_u_ref)
            out_i_ref[...] = jnp.zeros_like(out_i_ref)

        u0 = pl.multiple_of(mu * tu, tu)
        i0 = pl.multiple_of(ki * ti, ti)
        urows = pl.ds(u0, tu)
        irows = pl.ds(i0, ti)

        r_tile = r_ref[...]                                   # (tu, ti) bf16

        # User side: E_u'[urows] += R_tile @ E_i[irows]; accumulate over ki
        # in a small (tu, d) f32 scratch (single write to nxt/out per block).
        part_u = jnp.dot(r_tile, cur_i[irows, :],
                         preferred_element_type=jnp.float32)

        @pl.when(ki == 0)
        def _():
            acc_u[...] = part_u

        @pl.when(ki != 0)
        def _():
            acc_u[...] = acc_u[...] + part_u

        # Item side: E_i'[irows] += R_tile^T @ E_u[urows] (reuse resident tile),
        # accumulated over the slow (mu) axis directly in nxt_i.
        part_i = lax.dot_general(r_tile, cur_u[urows, :],
                                 dimension_numbers=(((0,), (0,)), ((), ())),
                                 preferred_element_type=jnp.float32)

        @pl.when(mu == 0)
        def _():
            nxt_i[irows, :] = part_i

        @pl.when(mu != 0)
        def _():
            nxt_i[irows, :] = nxt_i[irows, :] + part_i

        # User row block complete: commit and fold into the layer-sum.
        @pl.when(ki == n_ki_ - 1)
        def _():
            nxt_u[urows, :] = acc_u[...]
            out_u_ref[urows, :] = out_u_ref[urows, :] + acc_u[...]

        # Layer complete: fold items into the sum; E_{k+1} -> E_k (bf16).
        @pl.when((mu == n_mu_ - 1) & (ki == n_ki_ - 1))
        def _():
            out_i_ref[...] = out_i_ref[...] + nxt_i[...]
            cur_u[...] = nxt_u[...].astype(cur_u.dtype)
            cur_i[...] = nxt_i[...].astype(cur_i.dtype)

    # VMEM budget: double-buffered bf16 R tiles + resident outputs (2 bufs
    # budgeted) + bf16 cur + f32 nxt + per-block accumulator.
    vmem_need = (2 * tu * ti * 2
                 + 2 * (nu_pad + ni_pad) * d * 4
                 + (nu_pad + ni_pad) * d * 2
                 + (nu_pad + ni_pad) * d * 4
                 + tu * d * 4)
    try:
        phys = int(pltpu.get_tpu_info().vmem_capacity_bytes)
    except Exception:
        phys = 64 * 1024 * 1024              # v7x per-TC size: safe lower bound
    cap = max(phys - 8 * 1024 * 1024, 16 * 1024 * 1024)   # leave Mosaic headroom
    vmem_limit = int(min(max(2 * vmem_need, 32 * 1024 * 1024), cap))

    sum_u, sum_i = pl.pallas_call(
        kernel,
        out_shape=(jax.ShapeDtypeStruct((nu_pad, d), jnp.float32),
                   jax.ShapeDtypeStruct((ni_pad, d), jnp.float32)),
        grid_spec=pltpu.PrefetchScalarGridSpec(
            num_scalar_prefetch=0,
            grid=(num_layers, n_mu, n_ki),
            in_specs=[
                pl.BlockSpec(memory_space=pl.ANY),                 # E0 users (one-time DMA)
                pl.BlockSpec(memory_space=pl.ANY),                 # E0 items (one-time DMA)
                pl.BlockSpec((tu, ti), lambda l, m, k: (m, k)),    # streamed R tiles
            ],
            out_specs=(
                pl.BlockSpec((nu_pad, d), lambda l, m, k: (0, 0)),  # resident user layer-sum
                pl.BlockSpec((ni_pad, d), lambda l, m, k: (0, 0)),  # resident item layer-sum
            ),
            scratch_shapes=[
                pltpu.VMEM((nu_pad, d), jnp.bfloat16),   # cur_u  (E_k users, bf16 RHS)
                pltpu.VMEM((ni_pad, d), jnp.bfloat16),   # cur_i  (E_k items, bf16 RHS)
                pltpu.VMEM((nu_pad, d), jnp.float32),    # nxt_u  (E_{k+1} users)
                pltpu.VMEM((ni_pad, d), jnp.float32),    # nxt_i  (E_{k+1} items)
                pltpu.VMEM((tu, d), jnp.float32),        # acc_u  (row-block partial)
                pltpu.SemaphoreType.DMA,                 # E0 copy-in semaphore
            ],
        ),
        compiler_params=pltpu.CompilerParams(
            dimension_semantics=("arbitrary", "arbitrary", "arbitrary"),
            vmem_limit_bytes=vmem_limit,
        ),
    )(e0_u, e0_i, r_pad)

    layer_sum = jnp.concatenate([sum_u[:num_users], sum_i[:num_items]], axis=0)
    # Exact-f32 E_0 added here (kernel only saw its bf16 copy as matmul RHS).
    return (init_f32 + layer_sum) * (1.0 / (num_layers + 1))


# ----------------------------------------------------------------------------
# Forward pass wrapper matching LightGCNNetwork.forward semantics.
# ----------------------------------------------------------------------------
def lightgcn_forward(r_norm, init_embed, num_users, num_items, num_layers,
                     user_idxs, pos_item_idxs, neg_item_idxs,
                     *, max_tile_u=512, max_tile_i=1024):
    mean_embed = lightgcn_mean_embeddings(r_norm, init_embed, num_users, num_items,
                                          num_layers, max_tile_u=max_tile_u,
                                          max_tile_i=max_tile_i)
    all_user_embeds = mean_embed[:num_users]
    all_item_embeds = mean_embed[num_users:num_users + num_items]
    all_init_user_emb = init_embed[:num_users]
    all_init_item_emb = init_embed[num_users:num_users + num_items]
    return {
        "user_emb": jnp.take(all_user_embeds, user_idxs, axis=0),
        "pos_item_emb": jnp.take(all_item_embeds, pos_item_idxs, axis=0),
        "neg_item_emb": jnp.take(all_item_embeds, neg_item_idxs, axis=0),
        "user_0emb": jnp.take(all_init_user_emb, user_idxs, axis=0),
        "pos_item_0emb": jnp.take(all_init_item_emb, pos_item_idxs, axis=0),
        "neg_item_0emb": jnp.take(all_init_item_emb, neg_item_idxs, axis=0),
    }


if __name__ == "__main__":
    # Small deterministic problem; 256-tiles give a (3 layers x 2 x 2) grid so
    # both accumulation axes of the kernel are exercised.
    num_users, num_items = 300, 400
    vec_dim = 128                                # lane-dense embedding dim
    num_layers = 3
    batch = 8

    rng = np.random.RandomState(0)
    n_interact = 4000
    user_id_idxs = rng.randint(0, num_users, size=n_interact)
    item_id_idxs = rng.randint(0, num_items, size=n_interact)
    r_norm_np = build_norm_rating(num_users, num_items, user_id_idxs, item_id_idxs)
    r_norm = jnp.asarray(r_norm_np, dtype=jnp.float32)

    # Deterministic embedding init (stand-in for EmbeddingLayer / InitDist).
    key = jax.random.PRNGKey(0)
    init_embed = (0.1 * jax.random.normal(key, (num_users + num_items, vec_dim))
                  ).astype(jnp.float32)

    user_idxs = jnp.asarray(rng.randint(0, num_users, size=batch), dtype=jnp.int32)
    pos_item_idxs = jnp.asarray(rng.randint(0, num_items, size=batch), dtype=jnp.int32)
    neg_item_idxs = jnp.asarray(rng.randint(0, num_items, size=batch), dtype=jnp.int32)

    out = lightgcn_forward(r_norm, init_embed, num_users, num_items, num_layers,
                           user_idxs, pos_item_idxs, neg_item_idxs,
                           max_tile_u=256, max_tile_i=256)
    for v in out.values():
        jax.block_until_ready(v)

    # Pure-JAX f32 reference over the full normalized adjacency.
    n = num_users + num_items
    adj_np = np.zeros((n, n), dtype=np.float32)
    adj_np[:num_users, num_users:] = r_norm_np
    adj_np[num_users:, :num_users] = r_norm_np.T
    adj = jnp.asarray(adj_np)
    e = init_embed
    layer_list = [e]
    for _ in range(num_layers):
        e = adj @ e
        layer_list.append(e)
    mean_ref = jnp.mean(jnp.stack(layer_list), axis=0)

    u = np.asarray(user_idxs)
    p = np.asarray(pos_item_idxs)
    g = np.asarray(neg_item_idxs)
    # bf16 adjacency / E_k operands -> looser tolerance vs the f32 reference.
    np.testing.assert_allclose(np.asarray(out["user_emb"]),
                               np.asarray(mean_ref[:num_users][u]),
                               rtol=5e-2, atol=5e-3)
    np.testing.assert_allclose(np.asarray(out["pos_item_emb"]),
                               np.asarray(mean_ref[num_users:][p]),
                               rtol=5e-2, atol=5e-3)
    np.testing.assert_allclose(np.asarray(out["neg_item_emb"]),
                               np.asarray(mean_ref[num_users:][g]),
                               rtol=5e-2, atol=5e-3)
    np.testing.assert_allclose(np.asarray(out["user_0emb"]),
                               np.asarray(init_embed[:num_users][u]),
                               rtol=1e-6, atol=1e-6)
    np.testing.assert_allclose(np.asarray(out["pos_item_0emb"]),
                               np.asarray(init_embed[num_users:][p]),
                               rtol=1e-6, atol=1e-6)

    print("KERNEL_OK")
</pallas_src>

<mosaic_0001>
module attributes {stable_mosaic.version = 11 : i64} {
  func.func @kernel(%arg0: i32, %arg1: i32, %arg2: i32, %arg3: memref<512x128xbf16, #tpu.memory_space<any>>, %arg4: memref<512x128xbf16, #tpu.memory_space<any>>, %arg5: memref<256x256xbf16, #tpu.memory_space<vmem>>, %arg6: memref<512x128xf32, #tpu.memory_space<vmem>>, %arg7: memref<512x128xf32, #tpu.memory_space<vmem>>, %arg8: memref<512x128xbf16, #tpu.memory_space<vmem>>, %arg9: memref<512x128xbf16, #tpu.memory_space<vmem>>, %arg10: memref<512x128xf32, #tpu.memory_space<vmem>>, %arg11: memref<512x128xf32, #tpu.memory_space<vmem>>, %arg12: memref<256x128xf32, #tpu.memory_space<vmem>>, %arg13: memref<!tpu.dma_semaphore, #tpu.memory_space<semaphore_mem>>) attributes {dimension_semantics = [#tpu.dimension_semantics<arbitrary>, #tpu.dimension_semantics<arbitrary>, #tpu.dimension_semantics<arbitrary>], iteration_bounds = array<i64: 3, 2, 2>, scalar_prefetch = 0 : i64, scratch_operands = 6 : i64, tpu.core_type = #tpu.core_type<tc>, window_params = [{}, {}, {transform_indices = @transform_2, window_bounds = array<i64: 256, 256>}, {pipeline_mode = #tpu.pipeline_mode<synchronous>, transform_indices = @transform_3, window_bounds = array<i64: 512, 128>}, {pipeline_mode = #tpu.pipeline_mode<synchronous>, transform_indices = @transform_4, window_bounds = array<i64: 512, 128>}]} {
    %c0_i32 = arith.constant 0 : i32
    %0 = arith.cmpi eq, %arg0, %c0_i32 : i32
    %c0_i32_0 = arith.constant 0 : i32
    %1 = arith.cmpi eq, %arg1, %c0_i32_0 : i32
    %2 = arith.andi %0, %1 : i1
    %c0_i32_1 = arith.constant 0 : i32
    %3 = arith.cmpi eq, %arg2, %c0_i32_1 : i32
    %4 = arith.andi %2, %3 : i1
    %5 = arith.extui %4 : i1 to i32
    %c0_i32_2 = arith.constant 0 : i32
    %6 = arith.cmpi ne, %5, %c0_i32_2 : i32
    scf.if %6 {
      tpu.enqueue_dma source(%arg3 : memref<512x128xbf16, #tpu.memory_space<any>>) target(%arg8 : memref<512x128xbf16, #tpu.memory_space<vmem>>) target_semaphore(%arg13 : memref<!tpu.dma_semaphore, #tpu.memory_space<semaphore_mem>>)
      tpu.wait_dma2 semaphore(%arg13 : memref<!tpu.dma_semaphore, #tpu.memory_space<semaphore_mem>>) src(%arg3 : memref<512x128xbf16, #tpu.memory_space<any>>) dst(%arg8 : memref<512x128xbf16, #tpu.memory_space<vmem>>)
      tpu.enqueue_dma source(%arg4 : memref<512x128xbf16, #tpu.memory_space<any>>) target(%arg9 : memref<512x128xbf16, #tpu.memory_space<vmem>>) target_semaphore(%arg13 : memref<!tpu.dma_semaphore, #tpu.memory_space<semaphore_mem>>)
      tpu.wait_dma2 semaphore(%arg13 : memref<!tpu.dma_semaphore, #tpu.memory_space<semaphore_mem>>) src(%arg4 : memref<512x128xbf16, #tpu.memory_space<any>>) dst(%arg9 : memref<512x128xbf16, #tpu.memory_space<vmem>>)
      %cst_20 = arith.constant 0.000000e+00 : f32
      %38 = vector.broadcast %cst_20 : f32 to vector<512x128xf32>
      %c0_21 = arith.constant 0 : index
      %c0_22 = arith.constant 0 : index
      %39 = vector.load %arg6[%c0_21, %c0_22] : memref<512x128xf32, #tpu.memory_space<vmem>>, vector<512x128xf32>
      tpu.vector_store %arg6[%c0_21, %c0_22], %38 {strides = array<i32>} : memref<512x128xf32, #tpu.memory_space<vmem>>, vector<512x128xf32>,
      %cst_23 = arith.constant 0.000000e+00 : f32
      %40 = vector.broadcast %cst_23 : f32 to vector<512x128xf32>
      %c0_24 = arith.constant 0 : index
      %c0_25 = arith.constant 0 : index
      %41 = vector.load %arg7[%c0_24, %c0_25] : memref<512x128xf32, #tpu.memory_space<vmem>>, vector<512x128xf32>
      tpu.vector_store %arg7[%c0_24, %c0_25], %40 {strides = array<i32>} : memref<512x128xf32, #tpu.memory_space<vmem>>, vector<512x128xf32>,
    } else {
    }
    %c256_i32 = arith.constant 256 : i32
    %7 = arith.muli %arg1, %c256_i32 : i32
    %8 = tpu.assume_multiple %7, 256 : i32
    %c256_i32_3 = arith.constant 256 : i32
    %9 = arith.muli %arg2, %c256_i32_3 : i32
    %10 = tpu.assume_multiple %9, 256 : i32
    %c0 = arith.constant 0 : index
    %c0_4 = arith.constant 0 : index
    %11 = vector.load %arg5[%c0, %c0_4] : memref<256x256xbf16, #tpu.memory_space<vmem>>, vector<256x256xbf16>
    %12 = arith.index_cast %10 : i32 to index
    %c0_5 = arith.constant 0 : index
    %13 = vector.load %arg9[%12, %c0_5] : memref<512x128xbf16, #tpu.memory_space<vmem>>, vector<256x128xbf16>
    %cst = arith.constant dense<0.000000e+00> : vector<256x128xf32>
    %14 = tpu.matmul %11, %13, %cst {dimension_numbers = #tpu.dot_dimension_numbers<[1], [0], [0], [1], [0, 0, 1, 1], [], []>} : vector<256x256xbf16>, vector<256x128xbf16>, vector<256x128xf32> -> vector<256x128xf32>
    %c0_i32_6 = arith.constant 0 : i32
    %15 = arith.cmpi eq, %arg2, %c0_i32_6 : i32
    %16 = arith.extui %15 : i1 to i32
    %c0_i32_7 = arith.constant 0 : i32
    %17 = arith.cmpi ne, %16, %c0_i32_7 : i32
    scf.if %17 {
      %c0_20 = arith.constant 0 : index
      %c0_21 = arith.constant 0 : index
      %38 = vector.load %arg12[%c0_20, %c0_21] : memref<256x128xf32, #tpu.memory_space<vmem>>, vector<256x128xf32>
      tpu.vector_store %arg12[%c0_20, %c0_21], %14 {strides = array<i32>} : memref<256x128xf32, #tpu.memory_space<vmem>>, vector<256x128xf32>,
    } else {
    }
    %c0_i32_8 = arith.constant 0 : i32
    %18 = arith.cmpi ne, %arg2, %c0_i32_8 : i32
    %19 = arith.extui %18 : i1 to i32
    %c0_i32_9 = arith.constant 0 : i32
    %20 = arith.cmpi ne, %19, %c0_i32_9 : i32
    scf.if %20 {
      %c0_20 = arith.constant 0 : index
      %c0_21 = arith.constant 0 : index
      %38 = vector.load %arg12[%c0_20, %c0_21] : memref<256x128xf32, #tpu.memory_space<vmem>>, vector<256x128xf32>
      %39 = arith.addf %38, %14 : vector<256x128xf32>
      %c0_22 = arith.constant 0 : index
      %c0_23 = arith.constant 0 : index
      %40 = vector.load %arg12[%c0_22, %c0_23] : memref<256x128xf32, #tpu.memory_space<vmem>>, vector<256x128xf32>
      tpu.vector_store %arg12[%c0_22, %c0_23], %39 {strides = array<i32>} : memref<256x128xf32, #tpu.memory_space<vmem>>, vector<256x128xf32>,
    } else {
    }
    %21 = arith.index_cast %8 : i32 to index
    %c0_10 = arith.constant 0 : index
    %22 = vector.load %arg8[%21, %c0_10] : memref<512x128xbf16, #tpu.memory_space<vmem>>, vector<256x128xbf16>
    %cst_11 = arith.constant dense<0.000000e+00> : vector<256x128xf32>
    %23 = tpu.matmul %11, %22, %cst_11 {dimension_numbers = #tpu.dot_dimension_numbers<[0], [0], [1], [1], [0, 1, 1, 1], [], []>} : vector<256x256xbf16>, vector<256x128xbf16>, vector<256x128xf32> -> vector<256x128xf32>
    %c0_i32_12 = arith.constant 0 : i32
    %24 = arith.cmpi eq, %arg1, %c0_i32_12 : i32
    %25 = arith.extui %24 : i1 to i32
    %c0_i32_13 = arith.constant 0 : i32
    %26 = arith.cmpi ne, %25, %c0_i32_13 : i32
    scf.if %26 {
      %38 = arith.index_cast %10 : i32 to index
      %c0_20 = arith.constant 0 : index
      %39 = vector.load %arg11[%38, %c0_20] : memref<512x128xf32, #tpu.memory_space<vmem>>, vector<256x128xf32>
      tpu.vector_store %arg11[%38, %c0_20], %23 {strides = array<i32>} : memref<512x128xf32, #tpu.memory_space<vmem>>, vector<256x128xf32>,
    } else {
    }
    %c0_i32_14 = arith.constant 0 : i32
    %27 = arith.cmpi ne, %arg1, %c0_i32_14 : i32
    %28 = arith.extui %27 : i1 to i32
    %c0_i32_15 = arith.constant 0 : i32
    %29 = arith.cmpi ne, %28, %c0_i32_15 : i32
    scf.if %29 {
      %38 = arith.index_cast %10 : i32 to index
      %c0_20 = arith.constant 0 : index
      %39 = vector.load %arg11[%38, %c0_20] : memref<512x128xf32, #tpu.memory_space<vmem>>, vector<256x128xf32>
      %40 = arith.addf %39, %23 : vector<256x128xf32>
      %41 = arith.index_cast %10 : i32 to index
      %c0_21 = arith.constant 0 : index
      %42 = vector.load %arg11[%41, %c0_21] : memref<512x128xf32, #tpu.memory_space<vmem>>, vector<256x128xf32>
      tpu.vector_store %arg11[%41, %c0_21], %40 {strides = array<i32>} : memref<512x128xf32, #tpu.memory_space<vmem>>, vector<256x128xf32>,
    } else {
    }
    %c1_i32 = arith.constant 1 : i32
    %30 = arith.cmpi eq, %arg2, %c1_i32 : i32
    %31 = arith.extui %30 : i1 to i32
    %c0_i32_16 = arith.constant 0 : i32
    %32 = arith.cmpi ne, %31, %c0_i32_16 : i32
    scf.if %32 {
      %c0_20 = arith.constant 0 : index
      %c0_21 = arith.constant 0 : index
      %38 = vector.load %arg12[%c0_20, %c0_21] : memref<256x128xf32, #tpu.memory_space<vmem>>, vector<256x128xf32>
      %39 = arith.index_cast %8 : i32 to index
      %c0_22 = arith.constant 0 : index
      %40 = vector.load %arg10[%39, %c0_22] : memref<512x128xf32, #tpu.memory_space<vmem>>, vector<256x128xf32>
      tpu.vector_store %arg10[%39, %c0_22], %38 {strides = array<i32>} : memref<512x128xf32, #tpu.memory_space<vmem>>, vector<256x128xf32>,
      %41 = arith.index_cast %8 : i32 to index
      %c0_23 = arith.constant 0 : index
      %42 = vector.load %arg6[%41, %c0_23] : memref<512x128xf32, #tpu.memory_space<vmem>>, vector<256x128xf32>
      %c0_24 = arith.constant 0 : index
      %c0_25 = arith.constant 0 : index
      %43 = vector.load %arg12[%c0_24, %c0_25] : memref<256x128xf32, #tpu.memory_space<vmem>>, vector<256x128xf32>
      %44 = arith.addf %42, %43 : vector<256x128xf32>
      %45 = arith.index_cast %8 : i32 to index
      %c0_26 = arith.constant 0 : index
      %46 = vector.load %arg6[%45, %c0_26] : memref<512x128xf32, #tpu.memory_space<vmem>>, vector<256x128xf32>
      tpu.vector_store %arg6[%45, %c0_26], %44 {strides = array<i32>} : memref<512x128xf32, #tpu.memory_space<vmem>>, vector<256x128xf32>,
    } else {
    }
    %c1_i32_17 = arith.constant 1 : i32
    %33 = arith.cmpi eq, %arg1, %c1_i32_17 : i32
    %c1_i32_18 = arith.constant 1 : i32
    %34 = arith.cmpi eq, %arg2, %c1_i32_18 : i32
    %35 = arith.andi %33, %34 : i1
    %36 = arith.extui %35 : i1 to i32
    %c0_i32_19 = arith.constant 0 : i32
    %37 = arith.cmpi ne, %36, %c0_i32_19 : i32
    scf.if %37 {
      %c0_20 = arith.constant 0 : index
      %c0_21 = arith.constant 0 : index
      %38 = vector.load %arg7[%c0_20, %c0_21] : memref<512x128xf32, #tpu.memory_space<vmem>>, vector<512x128xf32>
      %c0_22 = arith.constant 0 : index
      %c0_23 = arith.constant 0 : index
      %39 = vector.load %arg11[%c0_22, %c0_23] : memref<512x128xf32, #tpu.memory_space<vmem>>, vector<512x128xf32>
      %40 = arith.addf %38, %39 : vector<512x128xf32>
      %c0_24 = arith.constant 0 : index
      %c0_25 = arith.constant 0 : index
      %41 = vector.load %arg7[%c0_24, %c0_25] : memref<512x128xf32, #tpu.memory_space<vmem>>, vector<512x128xf32>
      tpu.vector_store %arg7[%c0_24, %c0_25], %40 {strides = array<i32>} : memref<512x128xf32, #tpu.memory_space<vmem>>, vector<512x128xf32>,
      %c0_26 = arith.constant 0 : index
      %c0_27 = arith.constant 0 : index
      %42 = vector.load %arg10[%c0_26, %c0_27] : memref<512x128xf32, #tpu.memory_space<vmem>>, vector<512x128xf32>
      %43 = arith.truncf %42 : vector<512x128xf32> to vector<512x128xbf16>
      %c0_28 = arith.constant 0 : index
      %c0_29 = arith.constant 0 : index
      %44 = vector.load %arg8[%c0_28, %c0_29] : memref<512x128xbf16, #tpu.memory_space<vmem>>, vector<512x128xbf16>
      tpu.vector_store %arg8[%c0_28, %c0_29], %43 {strides = array<i32>} : memref<512x128xbf16, #tpu.memory_space<vmem>>, vector<512x128xbf16>,
      %c0_30 = arith.constant 0 : index
      %c0_31 = arith.constant 0 : index
      %45 = vector.load %arg11[%c0_30, %c0_31] : memref<512x128xf32, #tpu.memory_space<vmem>>, vector<512x128xf32>
      %46 = arith.truncf %45 : vector<512x128xf32> to vector<512x128xbf16>
      %c0_32 = arith.constant 0 : index
      %c0_33 = arith.constant 0 : index
      %47 = vector.load %arg9[%c0_32, %c0_33] : memref<512x128xbf16, #tpu.memory_space<vmem>>, vector<512x128xbf16>
      tpu.vector_store %arg9[%c0_32, %c0_33], %46 {strides = array<i32>} : memref<512x128xbf16, #tpu.memory_space<vmem>>, vector<512x128xbf16>,
    } else {
    }
    return
  }
  func.func @transform_2(%arg0: i32, %arg1: i32, %arg2: i32) -> (i32, i32) {
    %c0_i32 = arith.constant 0 : i32
    return %arg1, %arg2 : i32, i32
  }
  func.func @transform_3(%arg0: i32, %arg1: i32, %arg2: i32) -> (i32, i32) {
    %c0_i32 = arith.constant 0 : i32
    %c0_i32_0 = arith.constant 0 : i32
    %c0_i32_1 = arith.constant 0 : i32
    return %c0_i32, %c0_i32_0 : i32, i32
  }
  func.func @transform_4(%arg0: i32, %arg1: i32, %arg2: i32) -> (i32, i32) {
    %c0_i32 = arith.constant 0 : i32
    %c0_i32_0 = arith.constant 0 : i32
    %c0_i32_1 = arith.constant 0 : i32
    return %c0_i32, %c0_i32_0 : i32, i32
  }
}

</mosaic_0001>

<llo_original>
// kernel: tpu_custom_call.1
$region0: #{tpu_custom_call.1}
  #allocation0 [shape = 'u32[]', space=smem, size = 0x4, offset = 0x4, fixed_abs, tag = 'smem constant byte address 0x4 - core index']
  #allocation1 [shape = 'u32[144,128]{1,0:T(1,128)}', space=vmem, size = 0x12000, scoped, tag = 'internal scratch']
  #allocation2 [shape = 'bf16[512,128]{1,0:T(16,128)(2,1)}', space=vmem, size = 0x20000, scoped, tag = 'scratch operand']
  #allocation3 [shape = 'bf16[512,128]{1,0:T(16,128)(2,1)}', space=vmem, size = 0x20000, scoped, tag = 'scratch operand']
  #allocation4 [shape = 'f32[512,128]{1,0:T(8,128)}', space=vmem, size = 0x40000, scoped, tag = 'scratch operand']
  #allocation5 [shape = 'f32[512,128]{1,0:T(8,128)}', space=vmem, size = 0x40000, scoped, tag = 'scratch operand']
  #allocation6 [shape = 'f32[256,128]{1,0:T(8,128)}', space=vmem, size = 0x20000, scoped, tag = 'scratch operand']
  #allocation7 [shape = 's32[1]{0}', space=sflag, size = 0x4, scoped, tag = 'scratch operand']
  #allocation14 [shape = 's32[]', space=sflag, size = 0x4, offset = 0, fixed_abs, tag = 'sflag constant byte address 0x0 - dummy sync flag']
  #allocation15 [shape = 's32[]', space=sflag, size = 0x4, offset = 0, fixed_abs, tag = 'sflag constant byte address 0x0 - dummy sync flag']
  #allocation16 [shape = 'u32[]', space=smem, size = 0x4, offset = 0x44, fixed_abs, tag = 'smem constant byte address 0x44 - assertion arg 0']
  #allocation17 [shape = 'u32[]', space=smem, size = 0x4, offset = 0x48, fixed_abs, tag = 'smem constant byte address 0x48 - assertion arg 1']
  #allocation18 [shape = 's32[]', space=sflag, size = 0x4, offset = 0, fixed_abs, tag = 'sflag constant byte address 0x0 - dummy sync flag']
  #allocation19 [shape = 's32[]', space=sflag, size = 0x4, offset = 0, fixed_abs, tag = 'sflag constant byte address 0x0 - dummy sync flag']
  %s0 = inlined_call_operand.hbm [shape: bf16[512,128], index: 0, kind: input, shape index: {}]
  %s1 = inlined_call_operand.hbm [shape: bf16[512,128], index: 1, kind: input, shape index: {}]
  %s2 = inlined_call_operand.hbm [shape: bf16[512,512], index: 2, kind: input, shape index: {}]
  %s3 = inlined_call_operand.hbm [shape: f32[512,128], index: 3, kind: output, shape index: {0}]
  %s4 = inlined_call_operand.hbm [shape: f32[512,128], index: 4, kind: output, shape index: {1}]
  %5 = xla_tuple %s3, %s4
  %s6 = sld [smem:[#allocation0]]
  $region85: #{tpu_custom_call.1} parent=0
    _
  %s8 = ssub.s32 1, %s6
  %s9 = scalar_select 0, %s8, %s6
  $region1: #{tpu_custom_call.1} parent=0
    #allocation8 [shape = 'u8[262144]{0}', space=vmem, size = 0x40000, scoped, tag = 'input window, operand 2']
    #allocation9 [shape = 's32[2]{0}', space=sflag, size = 0x8, scoped, tag = 'scoped memory for tpu_custom_call.1']
    #allocation10 [shape = 's32[2]{0}', space=sflag, size = 0x8, scoped, tag = 'scoped memory for tpu_custom_call.1']
    #allocation11 [shape = 'u8[262144]{0}', space=vmem, size = 0x40000, scoped, tag = 'output window, operand 0, single buffered']
    #allocation12 [shape = 'u8[262144]{0}', space=vmem, size = 0x40000, scoped, tag = 'output window, operand 1, single buffered']
    #allocation13 [shape = 's32[1]{0}', space=sflag, size = 0x4, scoped, tag = 'scoped memory for tpu_custom_call.1']
    %10 = vsyncpa [#allocation9], 0
    %s11 = scalar_lea.sflag [#allocation9], 1
    %12 = vsyncpa %s11, 0
    %13 = vsyncpa [#allocation10], 0
    %14 = vsyncpa [#allocation13], 0
    loop: start=0, step=1, limit=14
    $region2: #{tpu_custom_call.1} parent=1 // loop_pre_header
      _
    $region3: #{tpu_custom_call.1} parent=1 // loop_header
      %s16 = sphi 0, %s20
      %p17 = scmp.ge.s32.totalorder %s16, 14
      %s23 = sphi 0, %s42
      %s24 = sphi 0, %s38
      %s25 = sphi 0, %s34
      %s26 = sphi 0, %s23
      %s27 = sphi 0, %s24
      %s28 = sphi 0, %s25
      %s29 = sphi 0, %s26
      %s30 = sphi 0, %s27
      %s31 = sphi 0, %s28
      %s47 = sphi 0, %s49
      %s50 = sphi 0, %s47
      %s51 = sphi 0, %s50
      %s67 = sphi 0, %s51
      %s71 = sphi 0, %s71
      %s73 = sphi 0, %s71
      %s74 = sphi 0, %s73
      %s88 = sphi 0, %s74
      %s92 = sphi 0, %s92
      %s94 = sphi 0, %s92
      %s95 = sphi 0, %s94
      %s109 = sphi 0, %s95
    $region4: #{tpu_custom_call.1} parent=1 // loop_header_branch
      %19 = sbr.rel (%p17) target = $region8
    $region5: #{tpu_custom_call.1} parent=1 // loop_body
      %s21 = ssub.s32 %s16, 1
      %s22 = ssub.s32 %s16, 2
      %s32 = sadd.s32 1, %s25
      %p33 = scmp.ge.s32.totalorder %s32, 2
      %s34 = scalar_select %p33, 0, %s32
      %s35 = sadd.s32 1, %s24
      %s36 = scalar_select %p33, %s35, %s24
      %p37 = scmp.ge.s32.totalorder %s36, 2
      %s38 = scalar_select %p37, 0, %s36
      %s39 = sadd.s32 1, %s23
      %s40 = scalar_select %p37, %s39, %s23
      %p41 = scmp.ge.s32.totalorder %s40, 3
      %s42 = scalar_select %p41, 0, %s40
      %s43 = ssub.s32 %s24, %s38
      %s44 = ssub.s32 %s25, %s34
      %s45 = sor.u32 %s43, %s44
      %p46 = scmp.eq.s32.totalorder %s45, 0
      %s48 = sadd.s32 %s47, 1
      %s49 = scalar_select %p46, %s47, %s48
      %p52 = pneg %p46
      %p53 = scmp.eq.s32.totalorder %s16, 11
      %p54 = por %p52, %p53
      %p55 = scmp.ne.s32.totalorder %s47, %s50
      %p56 = scmp.eq.s32.totalorder %s16, 0
      %p57 = por %p55, %p56
      %p58 = scmp.ne.s32.totalorder %s47, %s50
      %p59 = scmp.eq.s32.totalorder %s21, 11
      %p60 = por %p58, %p59
      %p61 = scmp.ne.s32.totalorder %s50, %s51
      %p62 = scmp.eq.s32.totalorder %s21, 0
      %p63 = por %p61, %p62
      %p64 = scmp.ne.s32.totalorder %s50, %s51
      %p65 = scmp.eq.s32.totalorder %s22, 11
      %p66 = por %p64, %p65
      %p68 = scmp.ne.s32.totalorder %s51, %s67
      %p69 = scmp.eq.s32.totalorder %s22, 0
      %p70 = por %p68, %p69
      %s72 = sadd.s32 %s71, 1
      %p75 = scmp.eq.s32.totalorder %s16, 11
      %p76 = scmp.ne.s32.totalorder %s71, %s73
      %p77 = scmp.eq.s32.totalorder %s16, 0
      %p78 = por %p76, %p77
      %p79 = scmp.ne.s32.totalorder %s71, %s73
      %p80 = scmp.eq.s32.totalorder %s21, 11
      %p81 = por %p79, %p80
      %p82 = scmp.ne.s32.totalorder %s73, %s74
      %p83 = scmp.eq.s32.totalorder %s21, 0
      %p84 = por %p82, %p83
      %p85 = scmp.ne.s32.totalorder %s73, %s74
      %p86 = scmp.eq.s32.totalorder %s22, 11
      %p87 = por %p85, %p86
      %p89 = scmp.ne.s32.totalorder %s74, %s88
      %p90 = scmp.eq.s32.totalorder %s22, 0
      %p91 = por %p89, %p90
      %s93 = sadd.s32 %s92, 1
      %p96 = scmp.eq.s32.totalorder %s16, 11
      %p97 = scmp.ne.s32.totalorder %s92, %s94
      %p98 = scmp.eq.s32.totalorder %s16, 0
      %p99 = por %p97, %p98
      %p100 = scmp.ne.s32.totalorder %s92, %s94
      %p101 = scmp.eq.s32.totalorder %s21, 11
      %p102 = por %p100, %p101
      %p103 = scmp.ne.s32.totalorder %s94, %s95
      %p104 = scmp.eq.s32.totalorder %s21, 0
      %p105 = por %p103, %p104
      %p106 = scmp.ne.s32.totalorder %s94, %s95
      %p107 = scmp.eq.s32.totalorder %s22, 11
      %p108 = por %p106, %p107
      %p110 = scmp.ne.s32.totalorder %s95, %s109
      %p111 = scmp.eq.s32.totalorder %s22, 0
      %p112 = por %p110, %p111
      %p113 = scmp.le.s32.totalorder 1, %s16
      %p114 = scmp.lt.s32.totalorder %s16, 13
      %p115 = pnand %p113, %p114
      %p116 = pneg %p115
      // Predicated region
      $region9: #{tpu_custom_call.1} parent=5 // pred_check
        _
      $region10: #{tpu_custom_call.1} parent=5 // pred_check_branch
        %118 = sbr.rel (%p115) target = $region12
      $region11: #{tpu_custom_call.1} parent=5 // pred_region
        %s119 = ssub.s32 %s16, 1
      $region12: #{tpu_custom_call.1} parent=5 // pred_fallthru
        _
      %p120 = scmp.lt.s32.totalorder %s16, 12
      // Predicated region
      $region13: #{tpu_custom_call.1} parent=5 // pred_check
        %p121 = pneg %p120
      $region14: #{tpu_custom_call.1} parent=5 // pred_check_branch
        %123 = sbr.rel (%p121) target = $region16
      $region15: #{tpu_custom_call.1} parent=5 // pred_region
        // Predicated region
        $region17: #{tpu_custom_call.1} parent=15 // pred_check
          %p124 = pneg %p57
        $region18: #{tpu_custom_call.1} parent=15 // pred_check_branch
          %126 = sbr.rel (%p124) target = $region20
        $region19: #{tpu_custom_call.1} parent=15 // pred_region
          %s127 = sand.u32 %s47, 1
          %s128 = scalar_lea.sflag [#allocation9], %s127
          %s129 = sand.u32 %s47, 1
          %s130 = smul.addr %s129, 256
          %s131 = scalar_lea.vmem [#allocation8], %s130
          %s132 = smul.u32 32, %s24
          %s133 = smul.u32 2, %s25
          %s135 = ssub.s32 4096, 4096
          %136 = vsyncadd %s128, %s135
          %s137 = smul.addr %s132, 4
          %s138 = sadd.s32 %s133, %s137
          %s139 = smul.addr %s138, 64
          %s140 = scalar_lea.hbm %s2, %s139
          %s141 = sshll.u32 %s131, 4
          %s142 = int_to_ptr.vmem [resolvable:$true] %s141
          %147 = dma.hbm_to_vmem [thread:$0]  %s140, 4096, %s142, %s128, 256, 128, 8
        $region20: #{tpu_custom_call.1} parent=15 // pred_fallthru
          _
      $region16: #{tpu_custom_call.1} parent=5 // pred_fallthru
        _
      %p148 = scmp.le.s32.totalorder 1, %s16
      %p149 = scmp.lt.s32.totalorder %s16, 13
      %p150 = pnand %p148, %p149
      %p151 = pneg %p150
      // Predicated region
      $region21: #{tpu_custom_call.1} parent=5 // pred_check
        _
      $region22: #{tpu_custom_call.1} parent=5 // pred_check_branch
        %153 = sbr.rel (%p150) target = $region24
      $region23: #{tpu_custom_call.1} parent=5 // pred_region
        %s154 = ssub.s32 %s16, 1
        %s155 = sand.u32 %s50, 1
        %s156 = scalar_lea.sflag [#allocation9], %s155
        %s157 = sand.u32 %s50, 1
        %s158 = smul.addr %s157, 256
        %s159 = scalar_lea.vmem [#allocation8], %s158
        // Predicated region
        $region25: #{tpu_custom_call.1} parent=23 // pred_check
          %p160 = pneg %p63
        $region26: #{tpu_custom_call.1} parent=23 // pred_check_branch
          %162 = sbr.rel (%p160) target = $region28
        $region27: #{tpu_custom_call.1} parent=23 // pred_region
          %163 = dma.done %s156, 4096
        $region28: #{tpu_custom_call.1} parent=23 // pred_fallthru
          _
        %s164 = sand.u32 %s50, 1
        %s165 = scalar_lea.sflag [#allocation9], %s164
        %s166 = sand.u32 %s50, 1
        %s167 = smul.addr %s166, 256
        %s168 = scalar_lea.vmem [#allocation8], %s167
        %p169 = pneg %p63
        %p170 = pneg %p60
        %p171 = pneg %p84
        %p172 = pneg %p81
        %p173 = pneg %p105
        %p174 = pneg %p102
        %s175 = smul.u32 32, %s27
        %s176 = smul.u32 2, %s28
        %p178 = scmp.eq.s32.totalorder %s26, 0
        %p179 = scmp.eq.s32.totalorder %s27, 0
        %p180 = pnand %p178, %p179
        %p181 = pneg %p180
        %p182 = scmp.eq.s32.totalorder %s28, 0
        %p183 = pnand %p181, %p182
        %p184 = pneg %p183
        // Predicated region
        $region29: #{tpu_custom_call.1} parent=23 // pred_check
          _
        $region30: #{tpu_custom_call.1} parent=23 // pred_check_branch
          %186 = sbr.rel (%p183) target = $region32
        $region31: #{tpu_custom_call.1} parent=23 // pred_region
          // Predicated region
          $region33: #{tpu_custom_call.1} parent=31 // pred_check
            _
          $region34: #{tpu_custom_call.1} parent=31 // pred_check_branch
            %188 = sbr.rel target = $region36
          $region35: #{tpu_custom_call.1} parent=31 // pred_region
            %189 = sst [smem:[#allocation16]] [#allocation15]
            %190 = sst [smem:[#allocation17]] [#allocation14]
          $region36: #{tpu_custom_call.1} parent=31 // pred_fallthru
            _
          %192 = shalt.err (0)
          %s194 = sshll.u32 [#allocation2], 4
          %s195 = int_to_ptr.vmem [resolvable:$true] %s194
          %197 = dma.hbm_to_vmem [thread:$0]  %s0, 4096, %s195, [#allocation7]
          %s198 = smul.u32 4, 64
          %s199 = smul.u32 %s198, 1
          %s200 = sshll.u32 %s199, 4
          %201 = dma.done [#allocation7], %s200
          // Predicated region
          $region37: #{tpu_custom_call.1} parent=31 // pred_check
            _
          $region38: #{tpu_custom_call.1} parent=31 // pred_check_branch
            %203 = sbr.rel target = $region40
          $region39: #{tpu_custom_call.1} parent=31 // pred_region
            %204 = sst [smem:[#allocation16]] [#allocation19]
            %205 = sst [smem:[#allocation17]] [#allocation18]
          $region40: #{tpu_custom_call.1} parent=31 // pred_fallthru
            _
          %207 = shalt.err (0)
          %s209 = sshll.u32 [#allocation3], 4
          %s210 = int_to_ptr.vmem [resolvable:$true] %s209
          %212 = dma.hbm_to_vmem [thread:$0]  %s1, 4096, %s210, [#allocation7]
          %s213 = sshll.u32 %s199, 4
          %214 = dma.done [#allocation7], %s213
          %215 = vst [vmem:[#allocation11] sm:$0xff] 0.0
          %216 = vst [vmem:[#allocation11 + $0x8] sm:$0xff] 0.0
          %217 = vst [vmem:[#allocation11 + $0x10] sm:$0xff] 0.0
          %218 = vst [vmem:[#allocation11 + $0x18] sm:$0xff] 0.0
          %219 = vst [vmem:[#allocation11 + $0x20] sm:$0xff] 0.0
          %220 = vst [vmem:[#allocation11 + $0x28] sm:$0xff] 0.0
          %221 = vst [vmem:[#allocation11 + $0x30] sm:$0xff] 0.0
          %222 = vst [vmem:[#allocation11 + $0x38] sm:$0xff] 0.0
          %223 = vst [vmem:[#allocation11 + $0x40] sm:$0xff] 0.0
          %224 = vst [vmem:[#allocation11 + $0x48] sm:$0xff] 0.0
          %225 = vst [vmem:[#allocation11 + $0x50] sm:$0xff] 0.0
          %226 = vst [vmem:[#allocation11 + $0x58] sm:$0xff] 0.0
          %227 = vst [vmem:[#allocation11 + $0x60] sm:$0xff] 0.0
          %228 = vst [vmem:[#allocation11 + $0x68] sm:$0xff] 0.0
          %229 = vst [vmem:[#allocation11 + $0x70] sm:$0xff] 0.0
          %230 = vst [vmem:[#allocation11 + $0x78] sm:$0xff] 0.0
          %231 = vst [vmem:[#allocation11 + $0x80] sm:$0xff] 0.0
          %232 = vst [vmem:[#allocation11 + $0x88] sm:$0xff] 0.0
          %233 = vst [vmem:[#allocation11 + $0x90] sm:$0xff] 0.0
          %234 = vst [vmem:[#allocation11 + $0x98] sm:$0xff] 0.0
          %235 = vst [vmem:[#allocation11 + $0xa0] sm:$0xff] 0.0
          %236 = vst [vmem:[#allocation11 + $0xa8] sm:$0xff] 0.0
          %237 = vst [vmem:[#allocation11 + $0xb0] sm:$0xff] 0.0
          %238 = vst [vmem:[#allocation11 + $0xb8] sm:$0xff] 0.0
          %239 = vst [vmem:[#allocation11 + $0xc0] sm:$0xff] 0.0
          %240 = vst [vmem:[#allocation11 + $0xc8] sm:$0xff] 0.0
          %241 = vst [vmem:[#allocation11 + $0xd0] sm:$0xff] 0.0
          %242 = vst [vmem:[#allocation11 + $0xd8] sm:$0xff] 0.0
          %243 = vst [vmem:[#allocation11 + $0xe0] sm:$0xff] 0.0
          %244 = vst [vmem:[#allocation11 + $0xe8] sm:$0xff] 0.0
          %245 = vst [vmem:[#allocation11 + $0xf0] sm:$0xff] 0.0
          %246 = vst [vmem:[#allocation11 + $0xf8] sm:$0xff] 0.0
          %247 = vst [vmem:[#allocation11 + $0x100] sm:$0xff] 0.0
          %248 = vst [vmem:[#allocation11 + $0x108] sm:$0xff] 0.0
          %249 = vst [vmem:[#allocation11 + $0x110] sm:$0xff] 0.0
          %250 = vst [vmem:[#allocation11 + $0x118] sm:$0xff] 0.0
          %251 = vst [vmem:[#allocation11 + $0x120] sm:$0xff] 0.0
          %252 = vst [vmem:[#allocation11 + $0x128] sm:$0xff] 0.0
          %253 = vst [vmem:[#allocation11 + $0x130] sm:$0xff] 0.0
          %254 = vst [vmem:[#allocation11 + $0x138] sm:$0xff] 0.0
          %255 = vst [vmem:[#allocation11 + $0x140] sm:$0xff] 0.0
          %256 = vst [vmem:[#allocation11 + $0x148] sm:$0xff] 0.0
          %257 = vst [vmem:[#allocation11 + $0x150] sm:$0xff] 0.0
          %258 = vst [vmem:[#allocation11 + $0x158] sm:$0xff] 0.0
          %259 = vst [vmem:[#allocation11 + $0x160] sm:$0xff] 0.0
          %260 = vst [vmem:[#allocation11 + $0x168] sm:$0xff] 0.0
          %261 = vst [vmem:[#allocation11 + $0x170] sm:$0xff] 0.0
          %262 = vst [vmem:[#allocation11 + $0x178] sm:$0xff] 0.0
          %263 = vst [vmem:[#allocation11 + $0x180] sm:$0xff] 0.0
          %264 = vst [vmem:[#allocation11 + $0x188] sm:$0xff] 0.0
          %265 = vst [vmem:[#allocation11 + $0x190] sm:$0xff] 0.0
          %266 = vst [vmem:[#allocation11 + $0x198] sm:$0xff] 0.0
          %267 = vst [vmem:[#allocation11 + $0x1a0] sm:$0xff] 0.0
          %268 = vst [vmem:[#allocation11 + $0x1a8] sm:$0xff] 0.0
          %269 = vst [vmem:[#allocation11 + $0x1b0] sm:$0xff] 0.0
          %270 = vst [vmem:[#allocation11 + $0x1b8] sm:$0xff] 0.0
          %271 = vst [vmem:[#allocation11 + $0x1c0] sm:$0xff] 0.0
          %272 = vst [vmem:[#allocation11 + $0x1c8] sm:$0xff] 0.0
          %273 = vst [vmem:[#allocation11 + $0x1d0] sm:$0xff] 0.0
          %274 = vst [vmem:[#allocation11 + $0x1d8] sm:$0xff] 0.0
          %275 = vst [vmem:[#allocation11 + $0x1e0] sm:$0xff] 0.0
          %276 = vst [vmem:[#allocation11 + $0x1e8] sm:$0xff] 0.0
          %277 = vst [vmem:[#allocation11 + $0x1f0] sm:$0xff] 0.0
          %278 = vst [vmem:[#allocation11 + $0x1f8] sm:$0xff] 0.0
          %279 = vst [vmem:[#allocation12] sm:$0xff] 0.0
          %280 = vst [vmem:[#allocation12 + $0x8] sm:$0xff] 0.0
          %281 = vst [vmem:[#allocation12 + $0x10] sm:$0xff] 0.0
          %282 = vst [vmem:[#allocation12 + $0x18] sm:$0xff] 0.0
          %283 = vst [vmem:[#allocation12 + $0x20] sm:$0xff] 0.0
          %284 = vst [vmem:[#allocation12 + $0x28] sm:$0xff] 0.0
          %285 = vst [vmem:[#allocation12 + $0x30] sm:$0xff] 0.0
          %286 = vst [vmem:[#allocation12 + $0x38] sm:$0xff] 0.0
          %287 = vst [vmem:[#allocation12 + $0x40] sm:$0xff] 0.0
          %288 = vst [vmem:[#allocation12 + $0x48] sm:$0xff] 0.0
          %289 = vst [vmem:[#allocation12 + $0x50] sm:$0xff] 0.0
          %290 = vst [vmem:[#allocation12 + $0x58] sm:$0xff] 0.0
          %291 = vst [vmem:[#allocation12 + $0x60] sm:$0xff] 0.0
          %292 = vst [vmem:[#allocation12 + $0x68] sm:$0xff] 0.0
          %293 = vst [vmem:[#allocation12 + $0x70] sm:$0xff] 0.0
          %294 = vst [vmem:[#allocation12 + $0x78] sm:$0xff] 0.0
          %295 = vst [vmem:[#allocation12 + $0x80] sm:$0xff] 0.0
          %296 = vst [vmem:[#allocation12 + $0x88] sm:$0xff] 0.0
          %297 = vst [vmem:[#allocation12 + $0x90] sm:$0xff] 0.0
          %298 = vst [vmem:[#allocation12 + $0x98] sm:$0xff] 0.0
          %299 = vst [vmem:[#allocation12 + $0xa0] sm:$0xff] 0.0
          %300 = vst [vmem:[#allocation12 + $0xa8] sm:$0xff] 0.0
          %301 = vst [vmem:[#allocation12 + $0xb0] sm:$0xff] 0.0
          %302 = vst [vmem:[#allocation12 + $0xb8] sm:$0xff] 0.0
          %303 = vst [vmem:[#allocation12 + $0xc0] sm:$0xff] 0.0
          %304 = vst [vmem:[#allocation12 + $0xc8] sm:$0xff] 0.0
          %305 = vst [vmem:[#allocation12 + $0xd0] sm:$0xff] 0.0
          %306 = vst [vmem:[#allocation12 + $0xd8] sm:$0xff] 0.0
          %307 = vst [vmem:[#allocation12 + $0xe0] sm:$0xff] 0.0
          %308 = vst [vmem:[#allocation12 + $0xe8] sm:$0xff] 0.0
          %309 = vst [vmem:[#allocation12 + $0xf0] sm:$0xff] 0.0
          %310 = vst [vmem:[#allocation12 + $0xf8] sm:$0xff] 0.0
          %311 = vst [vmem:[#allocation12 + $0x100] sm:$0xff] 0.0
          %312 = vst [vmem:[#allocation12 + $0x108] sm:$0xff] 0.0
          %313 = vst [vmem:[#allocation12 + $0x110] sm:$0xff] 0.0
          %314 = vst [vmem:[#allocation12 + $0x118] sm:$0xff] 0.0
          %315 = vst [vmem:[#allocation12 + $0x120] sm:$0xff] 0.0
          %316 = vst [vmem:[#allocation12 + $0x128] sm:$0xff] 0.0
          %317 = vst [vmem:[#allocation12 + $0x130] sm:$0xff] 0.0
          %318 = vst [vmem:[#allocation12 + $0x138] sm:$0xff] 0.0
          %319 = vst [vmem:[#allocation12 + $0x140] sm:$0xff] 0.0
          %320 = vst [vmem:[#allocation12 + $0x148] sm:$0xff] 0.0
          %321 = vst [vmem:[#allocation12 + $0x150] sm:$0xff] 0.0
          %322 = vst [vmem:[#allocation12 + $0x158] sm:$0xff] 0.0
          %323 = vst [vmem:[#allocation12 + $0x160] sm:$0xff] 0.0
          %324 = vst [vmem:[#allocation12 + $0x168] sm:$0xff] 0.0
          %325 = vst [vmem:[#allocation12 + $0x170] sm:$0xff] 0.0
          %326 = vst [vmem:[#allocation12 + $0x178] sm:$0xff] 0.0
          %327 = vst [vmem:[#allocation12 + $0x180] sm:$0xff] 0.0
          %328 = vst [vmem:[#allocation12 + $0x188] sm:$0xff] 0.0
          %329 = vst [vmem:[#allocation12 + $0x190] sm:$0xff] 0.0
          %330 = vst [vmem:[#allocation12 + $0x198] sm:$0xff] 0.0
          %331 = vst [vmem:[#allocation12 + $0x1a0] sm:$0xff] 0.0
          %332 = vst [vmem:[#allocation12 + $0x1a8] sm:$0xff] 0.0
          %333 = vst [vmem:[#allocation12 + $0x1b0] sm:$0xff] 0.0
          %334 = vst [vmem:[#allocation12 + $0x1b8] sm:$0xff] 0.0
          %335 = vst [vmem:[#allocation12 + $0x1c0] sm:$0xff] 0.0
          %336 = vst [vmem:[#allocation12 + $0x1c8] sm:$0xff] 0.0
          %337 = vst [vmem:[#allocation12 + $0x1d0] sm:$0xff] 0.0
          %338 = vst [vmem:[#allocation12 + $0x1d8] sm:$0xff] 0.0
          %339 = vst [vmem:[#allocation12 + $0x1e0] sm:$0xff] 0.0
          %340 = vst [vmem:[#allocation12 + $0x1e8] sm:$0xff] 0.0
          %341 = vst [vmem:[#allocation12 + $0x1f0] sm:$0xff] 0.0
          %342 = vst [vmem:[#allocation12 + $0x1f8] sm:$0xff] 0.0
        $region32: #{tpu_custom_call.1} parent=23 // pred_fallthru
          _
        %s343 = smul.u32 %s27, 256
        %s344 = smul.u32 %s28, 256
        %v345 = vld [vmem:[%s159] sm:$0xff]
        %v346 = vld [vmem:[%s159 + $0x8] sm:$0xff]
        %v347 = vld [vmem:[%s159 + $0x10] sm:$0xff]
        %v348 = vld [vmem:[%s159 + $0x18] sm:$0xff]
        %v349 = vld [vmem:[%s159 + $0x20] sm:$0xff]
        %v350 = vld [vmem:[%s159 + $0x28] sm:$0xff]
        %v351 = vld [vmem:[%s159 + $0x30] sm:$0xff]
        %v352 = vld [vmem:[%s159 + $0x38] sm:$0xff]
        %v353 = vld [vmem:[%s159 + $0x40] sm:$0xff]
        %v354 = vld [vmem:[%s159 + $0x48] sm:$0xff]
        %v355 = vld [vmem:[%s159 + $0x50] sm:$0xff]
        %v356 = vld [vmem:[%s159 + $0x58] sm:$0xff]
        %v357 = vld [vmem:[%s159 + $0x60] sm:$0xff]
        %v358 = vld [vmem:[%s159 + $0x68] sm:$0xff]
        %v359 = vld [vmem:[%s159 + $0x70] sm:$0xff]
        %v360 = vld [vmem:[%s159 + $0x78] sm:$0xff]
        %v361 = vld [vmem:[%s159 + $0x80] sm:$0xff]
        %v362 = vld [vmem:[%s159 + $0x88] sm:$0xff]
        %v363 = vld [vmem:[%s159 + $0x90] sm:$0xff]
        %v364 = vld [vmem:[%s159 + $0x98] sm:$0xff]
        %v365 = vld [vmem:[%s159 + $0xa0] sm:$0xff]
        %v366 = vld [vmem:[%s159 + $0xa8] sm:$0xff]
        %v367 = vld [vmem:[%s159 + $0xb0] sm:$0xff]
        %v368 = vld [vmem:[%s159 + $0xb8] sm:$0xff]
        %v369 = vld [vmem:[%s159 + $0xc0] sm:$0xff]
        %v370 = vld [vmem:[%s159 + $0xc8] sm:$0xff]
        %v371 = vld [vmem:[%s159 + $0xd0] sm:$0xff]
        %v372 = vld [vmem:[%s159 + $0xd8] sm:$0xff]
        %v373 = vld [vmem:[%s159 + $0xe0] sm:$0xff]
        %v374 = vld [vmem:[%s159 + $0xe8] sm:$0xff]
        %v375 = vld [vmem:[%s159 + $0xf0] sm:$0xff]
        %v376 = vld [vmem:[%s159 + $0xf8] sm:$0xff]
        %s377 = sshra.s32 %s344, 4
        %s378 = sand.u32 %s344, 15
        %s379 = smul.addr %s377, 8
        %s380 = scalar_lea.vmem [#allocation3], %s379
        %v381 = vld [vmem:[%s380] sm:$0xff]
        %v382 = vld [vmem:[%s380 + $0x8] sm:$0xff]
        %v383 = vld [vmem:[%s380 + $0x10] sm:$0xff]
        %v384 = vld [vmem:[%s380 + $0x18] sm:$0xff]
        %v385 = vld [vmem:[%s380 + $0x20] sm:$0xff]
        %v386 = vld [vmem:[%s380 + $0x28] sm:$0xff]
        %v387 = vld [vmem:[%s380 + $0x30] sm:$0xff]
        %v388 = vld [vmem:[%s380 + $0x38] sm:$0xff]
        %v389 = vld [vmem:[%s380 + $0x40] sm:$0xff]
        %v390 = vld [vmem:[%s380 + $0x48] sm:$0xff]
        %v391 = vld [vmem:[%s380 + $0x50] sm:$0xff]
        %v392 = vld [vmem:[%s380 + $0x58] sm:$0xff]
        %v393 = vld [vmem:[%s380 + $0x60] sm:$0xff]
        %v394 = vld [vmem:[%s380 + $0x68] sm:$0xff]
        %v395 = vld [vmem:[%s380 + $0x70] sm:$0xff]
        %v396 = vld [vmem:[%s380 + $0x78] sm:$0xff]
        %v429 = vunpack.c.l.b16 %v345
        %v430 = vunpack.c.h.b16 %v345
        %v431 = vunpack.c.l.b16 %v346
        %v432 = vunpack.c.h.b16 %v346
        %v433 = vunpack.c.l.b16 %v347
        %v434 = vunpack.c.h.b16 %v347
        %v435 = vunpack.c.l.b16 %v348
        %v436 = vunpack.c.h.b16 %v348
        %v437 = vunpack.c.l.b16 %v349
        %v438 = vunpack.c.h.b16 %v349
        %v439 = vunpack.c.l.b16 %v350
        %v440 = vunpack.c.h.b16 %v350
        %v441 = vunpack.c.l.b16 %v351
        %v442 = vunpack.c.h.b16 %v351
        %v443 = vunpack.c.l.b16 %v352
        %v444 = vunpack.c.h.b16 %v352
        %v445 = vunpack.c.l.b16 %v353
        %v446 = vunpack.c.h.b16 %v353
        %v447 = vunpack.c.l.b16 %v354
        %v448 = vunpack.c.h.b16 %v354
        %v449 = vunpack.c.l.b16 %v355
        %v450 = vunpack.c.h.b16 %v355
        %v451 = vunpack.c.l.b16 %v356
        %v452 = vunpack.c.h.b16 %v356
        %v453 = vunpack.c.l.b16 %v357
        %v454 = vunpack.c.h.b16 %v357
        %v455 = vunpack.c.l.b16 %v358
        %v456 = vunpack.c.h.b16 %v358
        %v457 = vunpack.c.l.b16 %v359
        %v458 = vunpack.c.h.b16 %v359
        %v459 = vunpack.c.l.b16 %v360
        %v460 = vunpack.c.h.b16 %v360
        %v461 = vunpack.c.l.b16 %v361
        %v462 = vunpack.c.h.b16 %v361
        %v463 = vunpack.c.l.b16 %v362
        %v464 = vunpack.c.h.b16 %v362
        %v465 = vunpack.c.l.b16 %v363
        %v466 = vunpack.c.h.b16 %v363
        %v467 = vunpack.c.l.b16 %v364
        %v468 = vunpack.c.h.b16 %v364
        %v469 = vunpack.c.l.b16 %v365
        %v470 = vunpack.c.h.b16 %v365
        %v471 = vunpack.c.l.b16 %v366
        %v472 = vunpack.c.h.b16 %v366
        %v473 = vunpack.c.l.b16 %v367
        %v474 = vunpack.c.h.b16 %v367
        %v475 = vunpack.c.l.b16 %v368
        %v476 = vunpack.c.h.b16 %v368
        %v477 = vunpack.c.l.b16 %v369
        %v478 = vunpack.c.h.b16 %v369
        %v479 = vunpack.c.l.b16 %v370
        %v480 = vunpack.c.h.b16 %v370
        %v481 = vunpack.c.l.b16 %v371
        %v482 = vunpack.c.h.b16 %v371
        %v483 = vunpack.c.l.b16 %v372
        %v484 = vunpack.c.h.b16 %v372
        %v485 = vunpack.c.l.b16 %v373
        %v486 = vunpack.c.h.b16 %v373
        %v487 = vunpack.c.l.b16 %v374
        %v488 = vunpack.c.h.b16 %v374
        %v489 = vunpack.c.l.b16 %v375
        %v490 = vunpack.c.h.b16 %v375
        %v491 = vunpack.c.l.b16 %v376
        %v492 = vunpack.c.h.b16 %v376
        %v493 = vpack.c.b16 %v431, %v429
        %v494 = vpack.c.b16 %v432, %v430
        %v495 = vpack.c.b16 %v435, %v433
        %v496 = vpack.c.b16 %v436, %v434
        %v497 = vpack.c.b16 %v439, %v437
        %v498 = vpack.c.b16 %v440, %v438
        %v499 = vpack.c.b16 %v443, %v441
        %v500 = vpack.c.b16 %v444, %v442
        %v501 = vpack.c.b16 %v447, %v445
        %v502 = vpack.c.b16 %v448, %v446
        %v503 = vpack.c.b16 %v451, %v449
        %v504 = vpack.c.b16 %v452, %v450
        %v505 = vpack.c.b16 %v455, %v453
        %v506 = vpack.c.b16 %v456, %v454
        %v507 = vpack.c.b16 %v459, %v457
        %v508 = vpack.c.b16 %v460, %v458
        %v509 = vpack.c.b16 %v463, %v461
        %v510 = vpack.c.b16 %v464, %v462
        %v511 = vpack.c.b16 %v467, %v465
        %v512 = vpack.c.b16 %v468, %v466
        %v513 = vpack.c.b16 %v471, %v469
        %v514 = vpack.c.b16 %v472, %v470
        %v515 = vpack.c.b16 %v475, %v473
        %v516 = vpack.c.b16 %v476, %v474
        %v517 = vpack.c.b16 %v479, %v477
        %v518 = vpack.c.b16 %v480, %v478
        %v519 = vpack.c.b16 %v483, %v481
        %v520 = vpack.c.b16 %v484, %v482
        %v521 = vpack.c.b16 %v487, %v485
        %v522 = vpack.c.b16 %v488, %v486
        %v523 = vpack.c.b16 %v491, %v489
        %v524 = vpack.c.b16 %v492, %v490
        %557 = vmatprep.subr.bf16.mxu0 0
        %558 = vmatpush1.bf16.msra.mxu0 %v381
        %559 = vmatprep.subr.bf16.mxu0 0
        %560 = vmatpush1.bf16.msra.mxu0 %v382
        %561 = vmatprep.subr.bf16.mxu0 0
        %562 = vmatpush1.bf16.msra.mxu0 %v383
        %563 = vmatprep.subr.bf16.mxu0 0
        %564 = vmatpush1.bf16.msra.mxu0 %v384
        %565 = vmatprep.subr.bf16.mxu0 0
        %566 = vmatpush1.bf16.msra.mxu0 %v385
        %567 = vmatprep.subr.bf16.mxu0 0
        %568 = vmatpush1.bf16.msra.mxu0 %v386
        %569 = vmatprep.subr.bf16.mxu0 0
        %570 = vmatpush1.bf16.msra.mxu0 %v387
        %571 = vmatprep.subr.bf16.mxu0 0
        %572 = vmatpush1.bf16.msra.mxu0 %v388
        %573 = vmatprep.subr.bf16.mxu0 0
        %574 = vmatpush1.bf16.msra.mxu0 %v389
        %575 = vmatprep.subr.bf16.mxu0 0
        %576 = vmatpush1.bf16.msra.mxu0 %v390
        %577 = vmatprep.subr.bf16.mxu0 0
        %578 = vmatpush1.bf16.msra.mxu0 %v391
        %579 = vmatprep.subr.bf16.mxu0 0
        %580 = vmatpush1.bf16.msra.mxu0 %v392
        %581 = vmatprep.subr.bf16.mxu0 0
        %582 = vmatpush1.bf16.msra.mxu0 %v393
        %583 = vmatprep.subr.bf16.mxu0 0
        %584 = vmatpush1.bf16.msra.mxu0 %v394
        %585 = vmatprep.subr.bf16.mxu0 0
        %586 = vmatpush1.bf16.msra.mxu0 %v395
        %587 = vmatprep.subr.bf16.mxu0 0
        %588 = vmatpush1.bf16.msra.mxu0 %v396
        %589 = vmatprep.mubr.bf16.mxu0 %v494
        %590 = vmatmul.mubr.bf16.gmra.mrb[0].mxu0 %v493
        %v591 = vpop.f32.mrb[0].mxu0
        %v592 = vadd.f32 0.0, %v591
        %v593 = vpop.f32.mrb[0].mxu0
        %v594 = vpop.f32.mrb[0].mxu0
        %v595 = vadd.f32 0.0, %v594
        %v596 = vpop.f32.mrb[0].mxu0
        %597 = vmatprep.mubr.bf16.mxu0 %v496
        %598 = vmatmul.mubr.bf16.gmra.mrb[0].mxu0 %v495
        %v599 = vpop.f32.mrb[0].mxu0
        %v600 = vadd.f32 0.0, %v599
        %v601 = vpop.f32.mrb[0].mxu0
        %v602 = vpop.f32.mrb[0].mxu0
        %v603 = vadd.f32 0.0, %v602
        %v604 = vpop.f32.mrb[0].mxu0
        %605 = vmatprep.mubr.bf16.mxu0 %v498
        %606 = vmatmul.mubr.bf16.gmra.mrb[0].mxu0 %v497
        %v607 = vpop.f32.mrb[0].mxu0
        %v608 = vadd.f32 0.0, %v607
        %v609 = vpop.f32.mrb[0].mxu0
        %v610 = vpop.f32.mrb[0].mxu0
        %v611 = vadd.f32 0.0, %v610
        %v612 = vpop.f32.mrb[0].mxu0
        %613 = vmatprep.mubr.bf16.mxu0 %v500
        %614 = vmatmul.mubr.bf16.gmra.mrb[0].mxu0 %v499
        %v615 = vpop.f32.mrb[0].mxu0
        %v616 = vadd.f32 0.0, %v615
        %v617 = vpop.f32.mrb[0].mxu0
        %v618 = vpop.f32.mrb[0].mxu0
        %v619 = vadd.f32 0.0, %v618
        %v620 = vpop.f32.mrb[0].mxu0
        %621 = vmatprep.mubr.bf16.mxu0 %v502
        %622 = vmatmul.mubr.bf16.gmra.mrb[0].mxu0 %v501
        %v623 = vpop.f32.mrb[0].mxu0
        %v624 = vadd.f32 0.0, %v623
        %v625 = vpop.f32.mrb[0].mxu0
        %v626 = vpop.f32.mrb[0].mxu0
        %v627 = vadd.f32 0.0, %v626
        %v628 = vpop.f32.mrb[0].mxu0
        %629 = vmatprep.mubr.bf16.mxu0 %v504
        %630 = vmatmul.mubr.bf16.gmra.mrb[0].mxu0 %v503
        %v631 = vpop.f32.mrb[0].mxu0
        %v632 = vadd.f32 0.0, %v631
        %v633 = vpop.f32.mrb[0].mxu0
        %v634 = vpop.f32.mrb[0].mxu0
        %v635 = vadd.f32 0.0, %v634
        %v636 = vpop.f32.mrb[0].mxu0
        %637 = vmatprep.mubr.bf16.mxu0 %v506
        %638 = vmatmul.mubr.bf16.gmra.mrb[0].mxu0 %v505
        %v639 = vpop.f32.mrb[0].mxu0
        %v640 = vadd.f32 0.0, %v639
        %v641 = vpop.f32.mrb[0].mxu0
        %v642 = vpop.f32.mrb[0].mxu0
        %v643 = vadd.f32 0.0, %v642
        %v644 = vpop.f32.mrb[0].mxu0
        %645 = vmatprep.mubr.bf16.mxu0 %v508
        %646 = vmatmul.mubr.bf16.gmra.mrb[0].mxu0 %v507
        %v647 = vpop.f32.mrb[0].mxu0
        %v648 = vadd.f32 0.0, %v647
        %v649 = vpop.f32.mrb[0].mxu0
        %v650 = vpop.f32.mrb[0].mxu0
        %v651 = vadd.f32 0.0, %v650
        %v652 = vpop.f32.mrb[0].mxu0
        %653 = vmatprep.mubr.bf16.mxu0 %v510
        %654 = vmatmul.mubr.bf16.gmra.mrb[0].mxu0 %v509
        %v655 = vpop.f32.mrb[0].mxu0
        %v656 = vadd.f32 0.0, %v655
        %v657 = vpop.f32.mrb[0].mxu0
        %v658 = vpop.f32.mrb[0].mxu0
        %v659 = vadd.f32 0.0, %v658
        %v660 = vpop.f32.mrb[0].mxu0
        %661 = vmatprep.mubr.bf16.mxu0 %v512
        %662 = vmatmul.mubr.bf16.gmra.mrb[0].mxu0 %v511
        %v663 = vpop.f32.mrb[0].mxu0
        %v664 = vadd.f32 0.0, %v663
        %v665 = vpop.f32.mrb[0].mxu0
        %v666 = vpop.f32.mrb[0].mxu0
        %v667 = vadd.f32 0.0, %v666
        %v668 = vpop.f32.mrb[0].mxu0
        %669 = vmatprep.mubr.bf16.mxu0 %v514
        %670 = vmatmul.mubr.bf16.gmra.mrb[0].mxu0 %v513
        %v671 = vpop.f32.mrb[0].mxu0
        %v672 = vadd.f32 0.0, %v671
        %v673 = vpop.f32.mrb[0].mxu0
        %v674 = vpop.f32.mrb[0].mxu0
        %v675 = vadd.f32 0.0, %v674
        %v676 = vpop.f32.mrb[0].mxu0
        %677 = vmatprep.mubr.bf16.mxu0 %v516
        %678 = vmatmul.mubr.bf16.gmra.mrb[0].mxu0 %v515
        %v679 = vpop.f32.mrb[0].mxu0
        %v680 = vadd.f32 0.0, %v679
        %v681 = vpop.f32.mrb[0].mxu0
        %v682 = vpop.f32.mrb[0].mxu0
        %v683 = vadd.f32 0.0, %v682
        %v684 = vpop.f32.mrb[0].mxu0
        %685 = vmatprep.mubr.bf16.mxu0 %v518
        %686 = vmatmul.mubr.bf16.gmra.mrb[0].mxu0 %v517
        %v687 = vpop.f32.mrb[0].mxu0
        %v688 = vadd.f32 0.0, %v687
        %v689 = vpop.f32.mrb[0].mxu0
        %v690 = vpop.f32.mrb[0].mxu0
        %v691 = vadd.f32 0.0, %v690
        %v692 = vpop.f32.mrb[0].mxu0
        %693 = vmatprep.mubr.bf16.mxu0 %v520
        %694 = vmatmul.mubr.bf16.gmra.mrb[0].mxu0 %v519
        %v695 = vpop.f32.mrb[0].mxu0
        %v696 = vadd.f32 0.0, %v695
        %v697 = vpop.f32.mrb[0].mxu0
        %v698 = vpop.f32.mrb[0].mxu0
        %v699 = vadd.f32 0.0, %v698
        %v700 = vpop.f32.mrb[0].mxu0
        %701 = vmatprep.mubr.bf16.mxu0 %v522
        %702 = vmatmul.mubr.bf16.gmra.mrb[0].mxu0 %v521
        %v703 = vpop.f32.mrb[0].mxu0
        %v704 = vadd.f32 0.0, %v703
        %v705 = vpop.f32.mrb[0].mxu0
        %v706 = vpop.f32.mrb[0].mxu0
        %v707 = vadd.f32 0.0, %v706
        %v708 = vpop.f32.mrb[0].mxu0
        %709 = vmatprep.mubr.bf16.mxu0 %v524
        %710 = vmatmul.mubr.bf16.gmra.mrb[0].mxu0 %v523
        %v711 = vpop.f32.mrb[0].mxu0
        %v712 = vadd.f32 0.0, %v711
        %v713 = vpop.f32.mrb[0].mxu0
        %v714 = vpop.f32.mrb[0].mxu0
        %v715 = vadd.f32 0.0, %v714
        %v716 = vpop.f32.mrb[0].mxu0
        %717 = vdwg.mxu0
        // Predicated region
        $region41: #{tpu_custom_call.1} parent=23 // pred_check
          %p718 = pneg %p182
        $region42: #{tpu_custom_call.1} parent=23 // pred_check_branch
          %720 = sbr.rel (%p718) target = $region44
        $region43: #{tpu_custom_call.1} parent=23 // pred_region
          %721 = vst [vmem:[#allocation6] sm:$0xff] %v592
          %722 = vst [vmem:[#allocation6 + $0x8] sm:$0xff] %v595
          %723 = vst [vmem:[#allocation6 + $0x10] sm:$0xff] %v600
          %724 = vst [vmem:[#allocation6 + $0x18] sm:$0xff] %v603
          %725 = vst [vmem:[#allocation6 + $0x20] sm:$0xff] %v608
          %726 = vst [vmem:[#allocation6 + $0x28] sm:$0xff] %v611
          %727 = vst [vmem:[#allocation6 + $0x30] sm:$0xff] %v616
          %728 = vst [vmem:[#allocation6 + $0x38] sm:$0xff] %v619
          %729 = vst [vmem:[#allocation6 + $0x40] sm:$0xff] %v624
          %730 = vst [vmem:[#allocation6 + $0x48] sm:$0xff] %v627
          %731 = vst [vmem:[#allocation6 + $0x50] sm:$0xff] %v632
          %732 = vst [vmem:[#allocation6 + $0x58] sm:$0xff] %v635
          %733 = vst [vmem:[#allocation6 + $0x60] sm:$0xff] %v640
          %734 = vst [vmem:[#allocation6 + $0x68] sm:$0xff] %v643
          %735 = vst [vmem:[#allocation6 + $0x70] sm:$0xff] %v648
          %736 = vst [vmem:[#allocation6 + $0x78] sm:$0xff] %v651
          %737 = vst [vmem:[#allocation6 + $0x80] sm:$0xff] %v656
          %738 = vst [vmem:[#allocation6 + $0x88] sm:$0xff] %v659
          %739 = vst [vmem:[#allocation6 + $0x90] sm:$0xff] %v664
          %740 = vst [vmem:[#allocation6 + $0x98] sm:$0xff] %v667
          %741 = vst [vmem:[#allocation6 + $0xa0] sm:$0xff] %v672
          %742 = vst [vmem:[#allocation6 + $0xa8] sm:$0xff] %v675
          %743 = vst [vmem:[#allocation6 + $0xb0] sm:$0xff] %v680
          %744 = vst [vmem:[#allocation6 + $0xb8] sm:$0xff] %v683
          %745 = vst [vmem:[#allocation6 + $0xc0] sm:$0xff] %v688
          %746 = vst [vmem:[#allocation6 + $0xc8] sm:$0xff] %v691
          %747 = vst [vmem:[#allocation6 + $0xd0] sm:$0xff] %v696
          %748 = vst [vmem:[#allocation6 + $0xd8] sm:$0xff] %v699
          %749 = vst [vmem:[#allocation6 + $0xe0] sm:$0xff] %v704
          %750 = vst [vmem:[#allocation6 + $0xe8] sm:$0xff] %v707
          %751 = vst [vmem:[#allocation6 + $0xf0] sm:$0xff] %v712
          %752 = vst [vmem:[#allocation6 + $0xf8] sm:$0xff] %v715
        $region44: #{tpu_custom_call.1} parent=23 // pred_fallthru
          _
        %p753 = scmp.ne.s32.totalorder %s28, 0
        // Predicated region
        $region45: #{tpu_custom_call.1} parent=23 // pred_check
          %p754 = pneg %p753
        $region46: #{tpu_custom_call.1} parent=23 // pred_check_branch
          %756 = sbr.rel (%p754) target = $region48
        $region47: #{tpu_custom_call.1} parent=23 // pred_region
          %v757 = vld [vmem:[#allocation6] sm:$0xff]
          %v758 = vld [vmem:[#allocation6 + $0x8] sm:$0xff]
          %v759 = vld [vmem:[#allocation6 + $0x10] sm:$0xff]
          %v760 = vld [vmem:[#allocation6 + $0x18] sm:$0xff]
          %v761 = vld [vmem:[#allocation6 + $0x20] sm:$0xff]
          %v762 = vld [vmem:[#allocation6 + $0x28] sm:$0xff]
          %v763 = vld [vmem:[#allocation6 + $0x30] sm:$0xff]
          %v764 = vld [vmem:[#allocation6 + $0x38] sm:$0xff]
          %v765 = vld [vmem:[#allocation6 + $0x40] sm:$0xff]
          %v766 = vld [vmem:[#allocation6 + $0x48] sm:$0xff]
          %v767 = vld [vmem:[#allocation6 + $0x50] sm:$0xff]
          %v768 = vld [vmem:[#allocation6 + $0x58] sm:$0xff]
          %v769 = vld [vmem:[#allocation6 + $0x60] sm:$0xff]
          %v770 = vld [vmem:[#allocation6 + $0x68] sm:$0xff]
          %v771 = vld [vmem:[#allocation6 + $0x70] sm:$0xff]
          %v772 = vld [vmem:[#allocation6 + $0x78] sm:$0xff]
          %v773 = vld [vmem:[#allocation6 + $0x80] sm:$0xff]
          %v774 = vld [vmem:[#allocation6 + $0x88] sm:$0xff]
          %v775 = vld [vmem:[#allocation6 + $0x90] sm:$0xff]
          %v776 = vld [vmem:[#allocation6 + $0x98] sm:$0xff]
          %v777 = vld [vmem:[#allocation6 + $0xa0] sm:$0xff]
          %v778 = vld [vmem:[#allocation6 + $0xa8] sm:$0xff]
          %v779 = vld [vmem:[#allocation6 + $0xb0] sm:$0xff]
          %v780 = vld [vmem:[#allocation6 + $0xb8] sm:$0xff]
          %v781 = vld [vmem:[#allocation6 + $0xc0] sm:$0xff]
          %v782 = vld [vmem:[#allocation6 + $0xc8] sm:$0xff]
          %v783 = vld [vmem:[#allocation6 + $0xd0] sm:$0xff]
          %v784 = vld [vmem:[#allocation6 + $0xd8] sm:$0xff]
          %v785 = vld [vmem:[#allocation6 + $0xe0] sm:$0xff]
          %v786 = vld [vmem:[#allocation6 + $0xe8] sm:$0xff]
          %v787 = vld [vmem:[#allocation6 + $0xf0] sm:$0xff]
          %v788 = vld [vmem:[#allocation6 + $0xf8] sm:$0xff]
          %v789 = vadd.f32 %v757, %v592
          %v790 = vadd.f32 %v758, %v595
          %v791 = vadd.f32 %v759, %v600
          %v792 = vadd.f32 %v760, %v603
          %v793 = vadd.f32 %v761, %v608
          %v794 = vadd.f32 %v762, %v611
          %v795 = vadd.f32 %v763, %v616
          %v796 = vadd.f32 %v764, %v619
          %v797 = vadd.f32 %v765, %v624
          %v798 = vadd.f32 %v766, %v627
          %v799 = vadd.f32 %v767, %v632
          %v800 = vadd.f32 %v768, %v635
          %v801 = vadd.f32 %v769, %v640
          %v802 = vadd.f32 %v770, %v643
          %v803 = vadd.f32 %v771, %v648
          %v804 = vadd.f32 %v772, %v651
          %v805 = vadd.f32 %v773, %v656
          %v806 = vadd.f32 %v774, %v659
          %v807 = vadd.f32 %v775, %v664
          %v808 = vadd.f32 %v776, %v667
          %v809 = vadd.f32 %v777, %v672
          %v810 = vadd.f32 %v778, %v675
          %v811 = vadd.f32 %v779, %v680
          %v812 = vadd.f32 %v780, %v683
          %v813 = vadd.f32 %v781, %v688
          %v814 = vadd.f32 %v782, %v691
          %v815 = vadd.f32 %v783, %v696
          %v816 = vadd.f32 %v784, %v699
          %v817 = vadd.f32 %v785, %v704
          %v818 = vadd.f32 %v786, %v707
          %v819 = vadd.f32 %v787, %v712
          %v820 = vadd.f32 %v788, %v715
          %821 = vst [vmem:[#allocation6] sm:$0xff] %v789
          %822 = vst [vmem:[#allocation6 + $0x8] sm:$0xff] %v790
          %823 = vst [vmem:[#allocation6 + $0x10] sm:$0xff] %v791
          %824 = vst [vmem:[#allocation6 + $0x18] sm:$0xff] %v792
          %825 = vst [vmem:[#allocation6 + $0x20] sm:$0xff] %v793
          %826 = vst [vmem:[#allocation6 + $0x28] sm:$0xff] %v794
          %827 = vst [vmem:[#allocation6 + $0x30] sm:$0xff] %v795
          %828 = vst [vmem:[#allocation6 + $0x38] sm:$0xff] %v796
          %829 = vst [vmem:[#allocation6 + $0x40] sm:$0xff] %v797
          %830 = vst [vmem:[#allocation6 + $0x48] sm:$0xff] %v798
          %831 = vst [vmem:[#allocation6 + $0x50] sm:$0xff] %v799
          %832 = vst [vmem:[#allocation6 + $0x58] sm:$0xff] %v800
          %833 = vst [vmem:[#allocation6 + $0x60] sm:$0xff] %v801
          %834 = vst [vmem:[#allocation6 + $0x68] sm:$0xff] %v802
          %835 = vst [vmem:[#allocation6 + $0x70] sm:$0xff] %v803
          %836 = vst [vmem:[#allocation6 + $0x78] sm:$0xff] %v804
          %837 = vst [vmem:[#allocation6 + $0x80] sm:$0xff] %v805
          %838 = vst [vmem:[#allocation6 + $0x88] sm:$0xff] %v806
          %839 = vst [vmem:[#allocation6 + $0x90] sm:$0xff] %v807
          %840 = vst [vmem:[#allocation6 + $0x98] sm:$0xff] %v808
          %841 = vst [vmem:[#allocation6 + $0xa0] sm:$0xff] %v809
          %842 = vst [vmem:[#allocation6 + $0xa8] sm:$0xff] %v810
          %843 = vst [vmem:[#allocation6 + $0xb0] sm:$0xff] %v811
          %844 = vst [vmem:[#allocation6 + $0xb8] sm:$0xff] %v812
          %845 = vst [vmem:[#allocation6 + $0xc0] sm:$0xff] %v813
          %846 = vst [vmem:[#allocation6 + $0xc8] sm:$0xff] %v814
          %847 = vst [vmem:[#allocation6 + $0xd0] sm:$0xff] %v815
          %848 = vst [vmem:[#allocation6 + $0xd8] sm:$0xff] %v816
          %849 = vst [vmem:[#allocation6 + $0xe0] sm:$0xff] %v817
          %850 = vst [vmem:[#allocation6 + $0xe8] sm:$0xff] %v818
          %851 = vst [vmem:[#allocation6 + $0xf0] sm:$0xff] %v819
          %852 = vst [vmem:[#allocation6 + $0xf8] sm:$0xff] %v820
        $region48: #{tpu_custom_call.1} parent=23 // pred_fallthru
          _
        %s853 = sshra.s32 %s343, 4
        %s854 = sand.u32 %s343, 15
        %s855 = smul.addr %s853, 8
        %s856 = scalar_lea.vmem [#allocation2], %s855
        %v857 = vld [vmem:[%s856] sm:$0xff]
        %v858 = vld [vmem:[%s856 + $0x8] sm:$0xff]
        %v859 = vld [vmem:[%s856 + $0x10] sm:$0xff]
        %v860 = vld [vmem:[%s856 + $0x18] sm:$0xff]
        %v861 = vld [vmem:[%s856 + $0x20] sm:$0xff]
        %v862 = vld [vmem:[%s856 + $0x28] sm:$0xff]
        %v863 = vld [vmem:[%s856 + $0x30] sm:$0xff]
        %v864 = vld [vmem:[%s856 + $0x38] sm:$0xff]
        %v865 = vld [vmem:[%s856 + $0x40] sm:$0xff]
        %v866 = vld [vmem:[%s856 + $0x48] sm:$0xff]
        %v867 = vld [vmem:[%s856 + $0x50] sm:$0xff]
        %v868 = vld [vmem:[%s856 + $0x58] sm:$0xff]
        %v869 = vld [vmem:[%s856 + $0x60] sm:$0xff]
        %v870 = vld [vmem:[%s856 + $0x68] sm:$0xff]
        %v871 = vld [vmem:[%s856 + $0x70] sm:$0xff]
        %v872 = vld [vmem:[%s856 + $0x78] sm:$0xff]
        %873 = vxpose.xlu0.c.b16.start [1/8] %v493, 128
        %874 = vxpose.xlu0.c.b16.cont [2/8] %v495, 128
        %875 = vxpose.xlu0.c.b16.cont [3/8] %v497, 128
        %876 = vxpose.xlu0.c.b16.cont [4/8] %v499, 128
        %877 = vxpose.xlu0.c.b16.cont [5/8] %v501, 128
        %878 = vxpose.xlu0.c.b16.cont [6/8] %v503, 128
        %879 = vxpose.xlu0.c.b16.cont [7/8] %v505, 128
        %880 = vxpose.xlu0.c.b16.end [8/8] %v507, 128
        %v881 = vpop.trf.xlu0
        %v882 = vpop.trf.xlu0
        %v883 = vpop.trf.xlu0
        %v884 = vpop.trf.xlu0
        %v885 = vpop.trf.xlu0
        %v886 = vpop.trf.xlu0
        %v887 = vpop.trf.xlu0
        %v888 = vpop.trf.xlu0
        %889 = vxpose.xlu0.c.b16.start [1/8] %v494, 128
        %890 = vxpose.xlu0.c.b16.cont [2/8] %v496, 128
        %891 = vxpose.xlu0.c.b16.cont [3/8] %v498, 128
        %892 = vxpose.xlu0.c.b16.cont [4/8] %v500, 128
        %893 = vxpose.xlu0.c.b16.cont [5/8] %v502, 128
        %894 = vxpose.xlu0.c.b16.cont [6/8] %v504, 128
        %895 = vxpose.xlu0.c.b16.cont [7/8] %v506, 128
        %896 = vxpose.xlu0.c.b16.end [8/8] %v508, 128
        %v897 = vpop.trf.xlu0
        %v898 = vpop.trf.xlu0
        %v899 = vpop.trf.xlu0
        %v900 = vpop.trf.xlu0
        %v901 = vpop.trf.xlu0
        %v902 = vpop.trf.xlu0
        %v903 = vpop.trf.xlu0
        %v904 = vpop.trf.xlu0
        %905 = vxpose.xlu0.c.b16.start [1/8] %v509, 128
        %906 = vxpose.xlu0.c.b16.cont [2/8] %v511, 128
        %907 = vxpose.xlu0.c.b16.cont [3/8] %v513, 128
        %908 = vxpose.xlu0.c.b16.cont [4/8] %v515, 128
        %909 = vxpose.xlu0.c.b16.cont [5/8] %v517, 128
        %910 = vxpose.xlu0.c.b16.cont [6/8] %v519, 128
        %911 = vxpose.xlu0.c.b16.cont [7/8] %v521, 128
        %912 = vxpose.xlu0.c.b16.end [8/8] %v523, 128
        %v913 = vpop.trf.xlu0
        %v914 = vpop.trf.xlu0
        %v915 = vpop.trf.xlu0
        %v916 = vpop.trf.xlu0
        %v917 = vpop.trf.xlu0
        %v918 = vpop.trf.xlu0
        %v919 = vpop.trf.xlu0
        %v920 = vpop.trf.xlu0
        %921 = vxpose.xlu0.c.b16.start [1/8] %v510, 128
        %922 = vxpose.xlu0.c.b16.cont [2/8] %v512, 128
        %923 = vxpose.xlu0.c.b16.cont [3/8] %v514, 128
        %924 = vxpose.xlu0.c.b16.cont [4/8] %v516, 128
        %925 = vxpose.xlu0.c.b16.cont [5/8] %v518, 128
        %926 = vxpose.xlu0.c.b16.cont [6/8] %v520, 128
        %927 = vxpose.xlu0.c.b16.cont [7/8] %v522, 128
        %928 = vxpose.xlu0.c.b16.end [8/8] %v524, 128
        %v929 = vpop.trf.xlu0
        %v930 = vpop.trf.xlu0
        %v931 = vpop.trf.xlu0
        %v932 = vpop.trf.xlu0
        %v933 = vpop.trf.xlu0
        %v934 = vpop.trf.xlu0
        %v935 = vpop.trf.xlu0
        %v936 = vpop.trf.xlu0
        %937 = vmatprep.subr.bf16.mxu0 0
        %938 = vmatpush1.bf16.msra.mxu0 %v857
        %939 = vmatprep.subr.bf16.mxu0 0
        %940 = vmatpush1.bf16.msra.mxu0 %v858
        %941 = vmatprep.subr.bf16.mxu0 0
        %942 = vmatpush1.bf16.msra.mxu0 %v859
        %943 = vmatprep.subr.bf16.mxu0 0
        %944 = vmatpush1.bf16.msra.mxu0 %v860
        %945 = vmatprep.subr.bf16.mxu0 0
        %946 = vmatpush1.bf16.msra.mxu0 %v861
        %947 = vmatprep.subr.bf16.mxu0 0
        %948 = vmatpush1.bf16.msra.mxu0 %v862
        %949 = vmatprep.subr.bf16.mxu0 0
        %950 = vmatpush1.bf16.msra.mxu0 %v863
        %951 = vmatprep.subr.bf16.mxu0 0
        %952 = vmatpush1.bf16.msra.mxu0 %v864
        %953 = vmatprep.subr.bf16.mxu0 0
        %954 = vmatpush1.bf16.msra.mxu0 %v865
        %955 = vmatprep.subr.bf16.mxu0 0
        %956 = vmatpush1.bf16.msra.mxu0 %v866
        %957 = vmatprep.subr.bf16.mxu0 0
        %958 = vmatpush1.bf16.msra.mxu0 %v867
        %959 = vmatprep.subr.bf16.mxu0 0
        %960 = vmatpush1.bf16.msra.mxu0 %v868
        %961 = vmatprep.subr.bf16.mxu0 0
        %962 = vmatpush1.bf16.msra.mxu0 %v869
        %963 = vmatprep.subr.bf16.mxu0 0
        %964 = vmatpush1.bf16.msra.mxu0 %v870
        %965 = vmatprep.subr.bf16.mxu0 0
        %966 = vmatpush1.bf16.msra.mxu0 %v871
        %967 = vmatprep.subr.bf16.mxu0 0
        %968 = vmatpush1.bf16.msra.mxu0 %v872
        %969 = vmatprep.mubr.bf16.mxu0 %v913
        %970 = vmatmul.mubr.bf16.gmra.mrb[0].mxu0 %v881
        %v971 = vpop.f32.mrb[0].mxu0
        %v972 = vadd.f32 0.0, %v971
        %v973 = vpop.f32.mrb[0].mxu0
        %v974 = vpop.f32.mrb[0].mxu0
        %v975 = vadd.f32 0.0, %v974
        %v976 = vpop.f32.mrb[0].mxu0
        %977 = vmatprep.mubr.bf16.mxu0 %v914
        %978 = vmatmul.mubr.bf16.gmra.mrb[0].mxu0 %v882
        %v979 = vpop.f32.mrb[0].mxu0
        %v980 = vadd.f32 0.0, %v979
        %v981 = vpop.f32.mrb[0].mxu0
        %v982 = vpop.f32.mrb[0].mxu0
        %v983 = vadd.f32 0.0, %v982
        %v984 = vpop.f32.mrb[0].mxu0
        %985 = vmatprep.mubr.bf16.mxu0 %v915
        %986 = vmatmul.mubr.bf16.gmra.mrb[0].mxu0 %v883
        %v987 = vpop.f32.mrb[0].mxu0
        %v988 = vadd.f32 0.0, %v987
        %v989 = vpop.f32.mrb[0].mxu0
        %v990 = vpop.f32.mrb[0].mxu0
        %v991 = vadd.f32 0.0, %v990
        %v992 = vpop.f32.mrb[0].mxu0
        %993 = vmatprep.mubr.bf16.mxu0 %v916
        %994 = vmatmul.mubr.bf16.gmra.mrb[0].mxu0 %v884
        %v995 = vpop.f32.mrb[0].mxu0
        %v996 = vadd.f32 0.0, %v995
        %v997 = vpop.f32.mrb[0].mxu0
        %v998 = vpop.f32.mrb[0].mxu0
        %v999 = vadd.f32 0.0, %v998
        %v1000 = vpop.f32.mrb[0].mxu0
        %1001 = vmatprep.mubr.bf16.mxu0 %v917
        %1002 = vmatmul.mubr.bf16.gmra.mrb[0].mxu0 %v885
        %v1003 = vpop.f32.mrb[0].mxu0
        %v1004 = vadd.f32 0.0, %v1003
        %v1005 = vpop.f32.mrb[0].mxu0
        %v1006 = vpop.f32.mrb[0].mxu0
        %v1007 = vadd.f32 0.0, %v1006
        %v1008 = vpop.f32.mrb[0].mxu0
        %1009 = vmatprep.mubr.bf16.mxu0 %v918
        %1010 = vmatmul.mubr.bf16.gmra.mrb[0].mxu0 %v886
        %v1011 = vpop.f32.mrb[0].mxu0
        %v1012 = vadd.f32 0.0, %v1011
        %v1013 = vpop.f32.mrb[0].mxu0
        %v1014 = vpop.f32.mrb[0].mxu0
        %v1015 = vadd.f32 0.0, %v1014
        %v1016 = vpop.f32.mrb[0].mxu0
        %1017 = vmatprep.mubr.bf16.mxu0 %v919
        %1018 = vmatmul.mubr.bf16.gmra.mrb[0].mxu0 %v887
        %v1019 = vpop.f32.mrb[0].mxu0
        %v1020 = vadd.f32 0.0, %v1019
        %v1021 = vpop.f32.mrb[0].mxu0
        %v1022 = vpop.f32.mrb[0].mxu0
        %v1023 = vadd.f32 0.0, %v1022
        %v1024 = vpop.f32.mrb[0].mxu0
        %1025 = vmatprep.mubr.bf16.mxu0 %v920
        %1026 = vmatmul.mubr.bf16.gmra.mrb[0].mxu0 %v888
        %v1027 = vpop.f32.mrb[0].mxu0
        %v1028 = vadd.f32 0.0, %v1027
        %v1029 = vpop.f32.mrb[0].mxu0
        %v1030 = vpop.f32.mrb[0].mxu0
        %v1031 = vadd.f32 0.0, %v1030
        %v1032 = vpop.f32.mrb[0].mxu0
        %1033 = vmatprep.mubr.bf16.mxu0 %v929
        %1034 = vmatmul.mubr.bf16.gmra.mrb[0].mxu0 %v897
        %v1035 = vpop.f32.mrb[0].mxu0
        %v1036 = vadd.f32 0.0, %v1035
        %v1037 = vpop.f32.mrb[0].mxu0
        %v1038 = vpop.f32.mrb[0].mxu0
        %v1039 = vadd.f32 0.0, %v1038
        %v1040 = vpop.f32.mrb[0].mxu0
        %1041 = vmatprep.mubr.bf16.mxu0 %v930
        %1042 = vmatmul.mubr.bf16.gmra.mrb[0].mxu0 %v898
        %v1043 = vpop.f32.mrb[0].mxu0
        %v1044 = vadd.f32 0.0, %v1043
        %v1045 = vpop.f32.mrb[0].mxu0
        %v1046 = vpop.f32.mrb[0].mxu0
        %v1047 = vadd.f32 0.0, %v1046
        %v1048 = vpop.f32.mrb[0].mxu0
        %1049 = vmatprep.mubr.bf16.mxu0 %v931
        %1050 = vmatmul.mubr.bf16.gmra.mrb[0].mxu0 %v899
        %v1051 = vpop.f32.mrb[0].mxu0
        %v1052 = vadd.f32 0.0, %v1051
        %v1053 = vpop.f32.mrb[0].mxu0
        %v1054 = vpop.f32.mrb[0].mxu0
        %v1055 = vadd.f32 0.0, %v1054
        %v1056 = vpop.f32.mrb[0].mxu0
        %1057 = vmatprep.mubr.bf16.mxu0 %v932
        %1058 = vmatmul.mubr.bf16.gmra.mrb[0].mxu0 %v900
        %v1059 = vpop.f32.mrb[0].mxu0
        %v1060 = vadd.f32 0.0, %v1059
        %v1061 = vpop.f32.mrb[0].mxu0
        %v1062 = vpop.f32.mrb[0].mxu0
        %v1063 = vadd.f32 0.0, %v1062
        %v1064 = vpop.f32.mrb[0].mxu0
        %1065 = vmatprep.mubr.bf16.mxu0 %v933
        %1066 = vmatmul.mubr.bf16.gmra.mrb[0].mxu0 %v901
        %v1067 = vpop.f32.mrb[0].mxu0
        %v1068 = vadd.f32 0.0, %v1067
        %v1069 = vpop.f32.mrb[0].mxu0
        %v1070 = vpop.f32.mrb[0].mxu0
        %v1071 = vadd.f32 0.0, %v1070
        %v1072 = vpop.f32.mrb[0].mxu0
        %1073 = vmatprep.mubr.bf16.mxu0 %v934
        %1074 = vmatmul.mubr.bf16.gmra.mrb[0].mxu0 %v902
        %v1075 = vpop.f32.mrb[0].mxu0
        %v1076 = vadd.f32 0.0, %v1075
        %v1077 = vpop.f32.mrb[0].mxu0
        %v1078 = vpop.f32.mrb[0].mxu0
        %v1079 = vadd.f32 0.0, %v1078
        %v1080 = vpop.f32.mrb[0].mxu0
        %1081 = vmatprep.mubr.bf16.mxu0 %v935
        %1082 = vmatmul.mubr.bf16.gmra.mrb[0].mxu0 %v903
        %v1083 = vpop.f32.mrb[0].mxu0
        %v1084 = vadd.f32 0.0, %v1083
        %v1085 = vpop.f32.mrb[0].mxu0
        %v1086 = vpop.f32.mrb[0].mxu0
        %v1087 = vadd.f32 0.0, %v1086
        %v1088 = vpop.f32.mrb[0].mxu0
        %1089 = vmatprep.mubr.bf16.mxu0 %v936
        %1090 = vmatmul.mubr.bf16.gmra.mrb[0].mxu0 %v904
        %v1091 = vpop.f32.mrb[0].mxu0
        %v1092 = vadd.f32 0.0, %v1091
        %v1093 = vpop.f32.mrb[0].mxu0
        %v1094 = vpop.f32.mrb[0].mxu0
        %v1095 = vadd.f32 0.0, %v1094
        %v1096 = vpop.f32.mrb[0].mxu0
        %1097 = vdwg.mxu0
        // Predicated region
        $region49: #{tpu_custom_call.1} parent=23 // pred_check
          %p1098 = pneg %p179
        $region50: #{tpu_custom_call.1} parent=23 // pred_check_branch
          %1100 = sbr.rel (%p1098) target = $region52
        $region51: #{tpu_custom_call.1} parent=23 // pred_region
          %s1101 = scalar_lea.vmem [#allocation5], %s344
          %1102 = vst [vmem:[%s1101] sm:$0xff] %v972
          %1103 = vst [vmem:[%s1101 + $0x8] sm:$0xff] %v975
          %1104 = vst [vmem:[%s1101 + $0x10] sm:$0xff] %v980
          %1105 = vst [vmem:[%s1101 + $0x18] sm:$0xff] %v983
          %1106 = vst [vmem:[%s1101 + $0x20] sm:$0xff] %v988
          %1107 = vst [vmem:[%s1101 + $0x28] sm:$0xff] %v991
          %1108 = vst [vmem:[%s1101 + $0x30] sm:$0xff] %v996
          %1109 = vst [vmem:[%s1101 + $0x38] sm:$0xff] %v999
          %1110 = vst [vmem:[%s1101 + $0x40] sm:$0xff] %v1004
          %1111 = vst [vmem:[%s1101 + $0x48] sm:$0xff] %v1007
          %1112 = vst [vmem:[%s1101 + $0x50] sm:$0xff] %v1012
          %1113 = vst [vmem:[%s1101 + $0x58] sm:$0xff] %v1015
          %1114 = vst [vmem:[%s1101 + $0x60] sm:$0xff] %v1020
          %1115 = vst [vmem:[%s1101 + $0x68] sm:$0xff] %v1023
          %1116 = vst [vmem:[%s1101 + $0x70] sm:$0xff] %v1028
          %1117 = vst [vmem:[%s1101 + $0x78] sm:$0xff] %v1031
          %1118 = vst [vmem:[%s1101 + $0x80] sm:$0xff] %v1036
          %1119 = vst [vmem:[%s1101 + $0x88] sm:$0xff] %v1039
          %1120 = vst [vmem:[%s1101 + $0x90] sm:$0xff] %v1044
          %1121 = vst [vmem:[%s1101 + $0x98] sm:$0xff] %v1047
          %1122 = vst [vmem:[%s1101 + $0xa0] sm:$0xff] %v1052
          %1123 = vst [vmem:[%s1101 + $0xa8] sm:$0xff] %v1055
          %1124 = vst [vmem:[%s1101 + $0xb0] sm:$0xff] %v1060
          %1125 = vst [vmem:[%s1101 + $0xb8] sm:$0xff] %v1063
          %1126 = vst [vmem:[%s1101 + $0xc0] sm:$0xff] %v1068
          %1127 = vst [vmem:[%s1101 + $0xc8] sm:$0xff] %v1071
          %1128 = vst [vmem:[%s1101 + $0xd0] sm:$0xff] %v1076
          %1129 = vst [vmem:[%s1101 + $0xd8] sm:$0xff] %v1079
          %1130 = vst [vmem:[%s1101 + $0xe0] sm:$0xff] %v1084
          %1131 = vst [vmem:[%s1101 + $0xe8] sm:$0xff] %v1087
          %1132 = vst [vmem:[%s1101 + $0xf0] sm:$0xff] %v1092
          %1133 = vst [vmem:[%s1101 + $0xf8] sm:$0xff] %v1095
        $region52: #{tpu_custom_call.1} parent=23 // pred_fallthru
          _
        %p1134 = scmp.ne.s32.totalorder %s27, 0
        // Predicated region
        $region53: #{tpu_custom_call.1} parent=23 // pred_check
          %p1135 = pneg %p1134
        $region54: #{tpu_custom_call.1} parent=23 // pred_check_branch
          %1137 = sbr.rel (%p1135) target = $region56
        $region55: #{tpu_custom_call.1} parent=23 // pred_region
          %s1138 = scalar_lea.vmem [#allocation5], %s344
          %v1139 = vld [vmem:[%s1138] sm:$0xff]
          %v1140 = vld [vmem:[%s1138 + $0x8] sm:$0xff]
          %v1141 = vld [vmem:[%s1138 + $0x10] sm:$0xff]
          %v1142 = vld [vmem:[%s1138 + $0x18] sm:$0xff]
          %v1143 = vld [vmem:[%s1138 + $0x20] sm:$0xff]
          %v1144 = vld [vmem:[%s1138 + $0x28] sm:$0xff]
          %v1145 = vld [vmem:[%s1138 + $0x30] sm:$0xff]
          %v1146 = vld [vmem:[%s1138 + $0x38] sm:$0xff]
          %v1147 = vld [vmem:[%s1138 + $0x40] sm:$0xff]
          %v1148 = vld [vmem:[%s1138 + $0x48] sm:$0xff]
          %v1149 = vld [vmem:[%s1138 + $0x50] sm:$0xff]
          %v1150 = vld [vmem:[%s1138 + $0x58] sm:$0xff]
          %v1151 = vld [vmem:[%s1138 + $0x60] sm:$0xff]
          %v1152 = vld [vmem:[%s1138 + $0x68] sm:$0xff]
          %v1153 = vld [vmem:[%s1138 + $0x70] sm:$0xff]
          %v1154 = vld [vmem:[%s1138 + $0x78] sm:$0xff]
          %v1155 = vld [vmem:[%s1138 + $0x80] sm:$0xff]
          %v1156 = vld [vmem:[%s1138 + $0x88] sm:$0xff]
          %v1157 = vld [vmem:[%s1138 + $0x90] sm:$0xff]
          %v1158 = vld [vmem:[%s1138 + $0x98] sm:$0xff]
          %v1159 = vld [vmem:[%s1138 + $0xa0] sm:$0xff]
          %v1160 = vld [vmem:[%s1138 + $0xa8] sm:$0xff]
          %v1161 = vld [vmem:[%s1138 + $0xb0] sm:$0xff]
          %v1162 = vld [vmem:[%s1138 + $0xb8] sm:$0xff]
          %v1163 = vld [vmem:[%s1138 + $0xc0] sm:$0xff]
          %v1164 = vld [vmem:[%s1138 + $0xc8] sm:$0xff]
          %v1165 = vld [vmem:[%s1138 + $0xd0] sm:$0xff]
          %v1166 = vld [vmem:[%s1138 + $0xd8] sm:$0xff]
          %v1167 = vld [vmem:[%s1138 + $0xe0] sm:$0xff]
          %v1168 = vld [vmem:[%s1138 + $0xe8] sm:$0xff]
          %v1169 = vld [vmem:[%s1138 + $0xf0] sm:$0xff]
          %v1170 = vld [vmem:[%s1138 + $0xf8] sm:$0xff]
          %v1171 = vadd.f32 %v1139, %v972
          %v1172 = vadd.f32 %v1140, %v975
          %v1173 = vadd.f32 %v1141, %v980
          %v1174 = vadd.f32 %v1142, %v983
          %v1175 = vadd.f32 %v1143, %v988
          %v1176 = vadd.f32 %v1144, %v991
          %v1177 = vadd.f32 %v1145, %v996
          %v1178 = vadd.f32 %v1146, %v999
          %v1179 = vadd.f32 %v1147, %v1004
          %v1180 = vadd.f32 %v1148, %v1007
          %v1181 = vadd.f32 %v1149, %v1012
          %v1182 = vadd.f32 %v1150, %v1015
          %v1183 = vadd.f32 %v1151, %v1020
          %v1184 = vadd.f32 %v1152, %v1023
          %v1185 = vadd.f32 %v1153, %v1028
          %v1186 = vadd.f32 %v1154, %v1031
          %v1187 = vadd.f32 %v1155, %v1036
          %v1188 = vadd.f32 %v1156, %v1039
          %v1189 = vadd.f32 %v1157, %v1044
          %v1190 = vadd.f32 %v1158, %v1047
          %v1191 = vadd.f32 %v1159, %v1052
          %v1192 = vadd.f32 %v1160, %v1055
          %v1193 = vadd.f32 %v1161, %v1060
          %v1194 = vadd.f32 %v1162, %v1063
          %v1195 = vadd.f32 %v1163, %v1068
          %v1196 = vadd.f32 %v1164, %v1071
          %v1197 = vadd.f32 %v1165, %v1076
          %v1198 = vadd.f32 %v1166, %v1079
          %v1199 = vadd.f32 %v1167, %v1084
          %v1200 = vadd.f32 %v1168, %v1087
          %v1201 = vadd.f32 %v1169, %v1092
          %v1202 = vadd.f32 %v1170, %v1095
          %1203 = vst [vmem:[%s1138] sm:$0xff] %v1171
          %1204 = vst [vmem:[%s1138 + $0x8] sm:$0xff] %v1172
          %1205 = vst [vmem:[%s1138 + $0x10] sm:$0xff] %v1173
          %1206 = vst [vmem:[%s1138 + $0x18] sm:$0xff] %v1174
          %1207 = vst [vmem:[%s1138 + $0x20] sm:$0xff] %v1175
          %1208 = vst [vmem:[%s1138 + $0x28] sm:$0xff] %v1176
          %1209 = vst [vmem:[%s1138 + $0x30] sm:$0xff] %v1177
          %1210 = vst [vmem:[%s1138 + $0x38] sm:$0xff] %v1178
          %1211 = vst [vmem:[%s1138 + $0x40] sm:$0xff] %v1179
          %1212 = vst [vmem:[%s1138 + $0x48] sm:$0xff] %v1180
          %1213 = vst [vmem:[%s1138 + $0x50] sm:$0xff] %v1181
          %1214 = vst [vmem:[%s1138 + $0x58] sm:$0xff] %v1182
          %1215 = vst [vmem:[%s1138 + $0x60] sm:$0xff] %v1183
          %1216 = vst [vmem:[%s1138 + $0x68] sm:$0xff] %v1184
          %1217 = vst [vmem:[%s1138 + $0x70] sm:$0xff] %v1185
          %1218 = vst [vmem:[%s1138 + $0x78] sm:$0xff] %v1186
          %1219 = vst [vmem:[%s1138 + $0x80] sm:$0xff] %v1187
          %1220 = vst [vmem:[%s1138 + $0x88] sm:$0xff] %v1188
          %1221 = vst [vmem:[%s1138 + $0x90] sm:$0xff] %v1189
          %1222 = vst [vmem:[%s1138 + $0x98] sm:$0xff] %v1190
          %1223 = vst [vmem:[%s1138 + $0xa0] sm:$0xff] %v1191
          %1224 = vst [vmem:[%s1138 + $0xa8] sm:$0xff] %v1192
          %1225 = vst [vmem:[%s1138 + $0xb0] sm:$0xff] %v1193
          %1226 = vst [vmem:[%s1138 + $0xb8] sm:$0xff] %v1194
          %1227 = vst [vmem:[%s1138 + $0xc0] sm:$0xff] %v1195
          %1228 = vst [vmem:[%s1138 + $0xc8] sm:$0xff] %v1196
          %1229 = vst [vmem:[%s1138 + $0xd0] sm:$0xff] %v1197
          %1230 = vst [vmem:[%s1138 + $0xd8] sm:$0xff] %v1198
          %1231 = vst [vmem:[%s1138 + $0xe0] sm:$0xff] %v1199
          %1232 = vst [vmem:[%s1138 + $0xe8] sm:$0xff] %v1200
          %1233 = vst [vmem:[%s1138 + $0xf0] sm:$0xff] %v1201
          %1234 = vst [vmem:[%s1138 + $0xf8] sm:$0xff] %v1202
        $region56: #{tpu_custom_call.1} parent=23 // pred_fallthru
          _
        %p1235 = scmp.eq.s32.totalorder %s28, 1
        // Predicated region
        $region57: #{tpu_custom_call.1} parent=23 // pred_check
          %p1236 = pneg %p1235
        $region58: #{tpu_custom_call.1} parent=23 // pred_check_branch
          %1238 = sbr.rel (%p1236) target = $region60
        $region59: #{tpu_custom_call.1} parent=23 // pred_region
          %v1239 = vld [vmem:[#allocation6] sm:$0xff]
          %v1240 = vld [vmem:[#allocation6 + $0x8] sm:$0xff]
          %v1241 = vld [vmem:[#allocation6 + $0x10] sm:$0xff]
          %v1242 = vld [vmem:[#allocation6 + $0x18] sm:$0xff]
          %v1243 = vld [vmem:[#allocation6 + $0x20] sm:$0xff]
          %v1244 = vld [vmem:[#allocation6 + $0x28] sm:$0xff]
          %v1245 = vld [vmem:[#allocation6 + $0x30] sm:$0xff]
          %v1246 = vld [vmem:[#allocation6 + $0x38] sm:$0xff]
          %v1247 = vld [vmem:[#allocation6 + $0x40] sm:$0xff]
          %v1248 = vld [vmem:[#allocation6 + $0x48] sm:$0xff]
          %v1249 = vld [vmem:[#allocation6 + $0x50] sm:$0xff]
          %v1250 = vld [vmem:[#allocation6 + $0x58] sm:$0xff]
          %v1251 = vld [vmem:[#allocation6 + $0x60] sm:$0xff]
          %v1252 = vld [vmem:[#allocation6 + $0x68] sm:$0xff]
          %v1253 = vld [vmem:[#allocation6 + $0x70] sm:$0xff]
          %v1254 = vld [vmem:[#allocation6 + $0x78] sm:$0xff]
          %v1255 = vld [vmem:[#allocation6 + $0x80] sm:$0xff]
          %v1256 = vld [vmem:[#allocation6 + $0x88] sm:$0xff]
          %v1257 = vld [vmem:[#allocation6 + $0x90] sm:$0xff]
          %v1258 = vld [vmem:[#allocation6 + $0x98] sm:$0xff]
          %v1259 = vld [vmem:[#allocation6 + $0xa0] sm:$0xff]
          %v1260 = vld [vmem:[#allocation6 + $0xa8] sm:$0xff]
          %v1261 = vld [vmem:[#allocation6 + $0xb0] sm:$0xff]
          %v1262 = vld [vmem:[#allocation6 + $0xb8] sm:$0xff]
          %v1263 = vld [vmem:[#allocation6 + $0xc0] sm:$0xff]
          %v1264 = vld [vmem:[#allocation6 + $0xc8] sm:$0xff]
          %v1265 = vld [vmem:[#allocation6 + $0xd0] sm:$0xff]
          %v1266 = vld [vmem:[#allocation6 + $0xd8] sm:$0xff]
          %v1267 = vld [vmem:[#allocation6 + $0xe0] sm:$0xff]
          %v1268 = vld [vmem:[#allocation6 + $0xe8] sm:$0xff]
          %v1269 = vld [vmem:[#allocation6 + $0xf0] sm:$0xff]
          %v1270 = vld [vmem:[#allocation6 + $0xf8] sm:$0xff]
          %s1271 = scalar_lea.vmem [#allocation4], %s343
          %1272 = vst [vmem:[%s1271] sm:$0xff] %v1239
          %1273 = vst [vmem:[%s1271 + $0x8] sm:$0xff] %v1240
          %1274 = vst [vmem:[%s1271 + $0x10] sm:$0xff] %v1241
          %1275 = vst [vmem:[%s1271 + $0x18] sm:$0xff] %v1242
          %1276 = vst [vmem:[%s1271 + $0x20] sm:$0xff] %v1243
          %1277 = vst [vmem:[%s1271 + $0x28] sm:$0xff] %v1244
          %1278 = vst [vmem:[%s1271 + $0x30] sm:$0xff] %v1245
          %1279 = vst [vmem:[%s1271 + $0x38] sm:$0xff] %v1246
          %1280 = vst [vmem:[%s1271 + $0x40] sm:$0xff] %v1247
          %1281 = vst [vmem:[%s1271 + $0x48] sm:$0xff] %v1248
          %1282 = vst [vmem:[%s1271 + $0x50] sm:$0xff] %v1249
          %1283 = vst [vmem:[%s1271 + $0x58] sm:$0xff] %v1250
          %1284 = vst [vmem:[%s1271 + $0x60] sm:$0xff] %v1251
          %1285 = vst [vmem:[%s1271 + $0x68] sm:$0xff] %v1252
          %1286 = vst [vmem:[%s1271 + $0x70] sm:$0xff] %v1253
          %1287 = vst [vmem:[%s1271 + $0x78] sm:$0xff] %v1254
          %1288 = vst [vmem:[%s1271 + $0x80] sm:$0xff] %v1255
          %1289 = vst [vmem:[%s1271 + $0x88] sm:$0xff] %v1256
          %1290 = vst [vmem:[%s1271 + $0x90] sm:$0xff] %v1257
          %1291 = vst [vmem:[%s1271 + $0x98] sm:$0xff] %v1258
          %1292 = vst [vmem:[%s1271 + $0xa0] sm:$0xff] %v1259
          %1293 = vst [vmem:[%s1271 + $0xa8] sm:$0xff] %v1260
          %1294 = vst [vmem:[%s1271 + $0xb0] sm:$0xff] %v1261
          %1295 = vst [vmem:[%s1271 + $0xb8] sm:$0xff] %v1262
          %1296 = vst [vmem:[%s1271 + $0xc0] sm:$0xff] %v1263
          %1297 = vst [vmem:[%s1271 + $0xc8] sm:$0xff] %v1264
          %1298 = vst [vmem:[%s1271 + $0xd0] sm:$0xff] %v1265
          %1299 = vst [vmem:[%s1271 + $0xd8] sm:$0xff] %v1266
          %1300 = vst [vmem:[%s1271 + $0xe0] sm:$0xff] %v1267
          %1301 = vst [vmem:[%s1271 + $0xe8] sm:$0xff] %v1268
          %1302 = vst [vmem:[%s1271 + $0xf0] sm:$0xff] %v1269
          %1303 = vst [vmem:[%s1271 + $0xf8] sm:$0xff] %v1270
          %s1304 = scalar_lea.vmem [#allocation11], %s343
          %v1305 = vld [vmem:[%s1304] sm:$0xff]
          %v1306 = vld [vmem:[%s1304 + $0x8] sm:$0xff]
          %v1307 = vld [vmem:[%s1304 + $0x10] sm:$0xff]
          %v1308 = vld [vmem:[%s1304 + $0x18] sm:$0xff]
          %v1309 = vld [vmem:[%s1304 + $0x20] sm:$0xff]
          %v1310 = vld [vmem:[%s1304 + $0x28] sm:$0xff]
          %v1311 = vld [vmem:[%s1304 + $0x30] sm:$0xff]
          %v1312 = vld [vmem:[%s1304 + $0x38] sm:$0xff]
          %v1313 = vld [vmem:[%s1304 + $0x40] sm:$0xff]
          %v1314 = vld [vmem:[%s1304 + $0x48] sm:$0xff]
          %v1315 = vld [vmem:[%s1304 + $0x50] sm:$0xff]
          %v1316 = vld [vmem:[%s1304 + $0x58] sm:$0xff]
          %v1317 = vld [vmem:[%s1304 + $0x60] sm:$0xff]
          %v1318 = vld [vmem:[%s1304 + $0x68] sm:$0xff]
          %v1319 = vld [vmem:[%s1304 + $0x70] sm:$0xff]
          %v1320 = vld [vmem:[%s1304 + $0x78] sm:$0xff]
          %v1321 = vld [vmem:[%s1304 + $0x80] sm:$0xff]
          %v1322 = vld [vmem:[%s1304 + $0x88] sm:$0xff]
          %v1323 = vld [vmem:[%s1304 + $0x90] sm:$0xff]
          %v1324 = vld [vmem:[%s1304 + $0x98] sm:$0xff]
          %v1325 = vld [vmem:[%s1304 + $0xa0] sm:$0xff]
          %v1326 = vld [vmem:[%s1304 + $0xa8] sm:$0xff]
          %v1327 = vld [vmem:[%s1304 + $0xb0] sm:$0xff]
          %v1328 = vld [vmem:[%s1304 + $0xb8] sm:$0xff]
          %v1329 = vld [vmem:[%s1304 + $0xc0] sm:$0xff]
          %v1330 = vld [vmem:[%s1304 + $0xc8] sm:$0xff]
          %v1331 = vld [vmem:[%s1304 + $0xd0] sm:$0xff]
          %v1332 = vld [vmem:[%s1304 + $0xd8] sm:$0xff]
          %v1333 = vld [vmem:[%s1304 + $0xe0] sm:$0xff]
          %v1334 = vld [vmem:[%s1304 + $0xe8] sm:$0xff]
          %v1335 = vld [vmem:[%s1304 + $0xf0] sm:$0xff]
          %v1336 = vld [vmem:[%s1304 + $0xf8] sm:$0xff]
          %v1337 = vld [vmem:[#allocation6] sm:$0xff]
          %v1338 = vld [vmem:[#allocation6 + $0x8] sm:$0xff]
          %v1339 = vld [vmem:[#allocation6 + $0x10] sm:$0xff]
          %v1340 = vld [vmem:[#allocation6 + $0x18] sm:$0xff]
          %v1341 = vld [vmem:[#allocation6 + $0x20] sm:$0xff]
          %v1342 = vld [vmem:[#allocation6 + $0x28] sm:$0xff]
          %v1343 = vld [vmem:[#allocation6 + $0x30] sm:$0xff]
          %v1344 = vld [vmem:[#allocation6 + $0x38] sm:$0xff]
          %v1345 = vld [vmem:[#allocation6 + $0x40] sm:$0xff]
          %v1346 = vld [vmem:[#allocation6 + $0x48] sm:$0xff]
          %v1347 = vld [vmem:[#allocation6 + $0x50] sm:$0xff]
          %v1348 = vld [vmem:[#allocation6 + $0x58] sm:$0xff]
          %v1349 = vld [vmem:[#allocation6 + $0x60] sm:$0xff]
          %v1350 = vld [vmem:[#allocation6 + $0x68] sm:$0xff]
          %v1351 = vld [vmem:[#allocation6 + $0x70] sm:$0xff]
          %v1352 = vld [vmem:[#allocation6 + $0x78] sm:$0xff]
          %v1353 = vld [vmem:[#allocation6 + $0x80] sm:$0xff]
          %v1354 = vld [vmem:[#allocation6 + $0x88] sm:$0xff]
          %v1355 = vld [vmem:[#allocation6 + $0x90] sm:$0xff]
          %v1356 = vld [vmem:[#allocation6 + $0x98] sm:$0xff]
          %v1357 = vld [vmem:[#allocation6 + $0xa0] sm:$0xff]
          %v1358 = vld [vmem:[#allocation6 + $0xa8] sm:$0xff]
          %v1359 = vld [vmem:[#allocation6 + $0xb0] sm:$0xff]
          %v1360 = vld [vmem:[#allocation6 + $0xb8] sm:$0xff]
          %v1361 = vld [vmem:[#allocation6 + $0xc0] sm:$0xff]
          %v1362 = vld [vmem:[#allocation6 + $0xc8] sm:$0xff]
          %v1363 = vld [vmem:[#allocation6 + $0xd0] sm:$0xff]
          %v1364 = vld [vmem:[#allocation6 + $0xd8] sm:$0xff]
          %v1365 = vld [vmem:[#allocation6 + $0xe0] sm:$0xff]
          %v1366 = vld [vmem:[#allocation6 + $0xe8] sm:$0xff]
          %v1367 = vld [vmem:[#allocation6 + $0xf0] sm:$0xff]
          %v1368 = vld [vmem:[#allocation6 + $0xf8] sm:$0xff]
          %v1369 = vadd.f32 %v1305, %v1337
          %v1370 = vadd.f32 %v1306, %v1338
          %v1371 = vadd.f32 %v1307, %v1339
          %v1372 = vadd.f32 %v1308, %v1340
          %v1373 = vadd.f32 %v1309, %v1341
          %v1374 = vadd.f32 %v1310, %v1342
          %v1375 = vadd.f32 %v1311, %v1343
          %v1376 = vadd.f32 %v1312, %v1344
          %v1377 = vadd.f32 %v1313, %v1345
          %v1378 = vadd.f32 %v1314, %v1346
          %v1379 = vadd.f32 %v1315, %v1347
          %v1380 = vadd.f32 %v1316, %v1348
          %v1381 = vadd.f32 %v1317, %v1349
          %v1382 = vadd.f32 %v1318, %v1350
          %v1383 = vadd.f32 %v1319, %v1351
          %v1384 = vadd.f32 %v1320, %v1352
          %v1385 = vadd.f32 %v1321, %v1353
          %v1386 = vadd.f32 %v1322, %v1354
          %v1387 = vadd.f32 %v1323, %v1355
          %v1388 = vadd.f32 %v1324, %v1356
          %v1389 = vadd.f32 %v1325, %v1357
          %v1390 = vadd.f32 %v1326, %v1358
          %v1391 = vadd.f32 %v1327, %v1359
          %v1392 = vadd.f32 %v1328, %v1360
          %v1393 = vadd.f32 %v1329, %v1361
          %v1394 = vadd.f32 %v1330, %v1362
          %v1395 = vadd.f32 %v1331, %v1363
          %v1396 = vadd.f32 %v1332, %v1364
          %v1397 = vadd.f32 %v1333, %v1365
          %v1398 = vadd.f32 %v1334, %v1366
          %v1399 = vadd.f32 %v1335, %v1367
          %v1400 = vadd.f32 %v1336, %v1368
          %1401 = vst [vmem:[%s1304] sm:$0xff] %v1369
          %1402 = vst [vmem:[%s1304 + $0x8] sm:$0xff] %v1370
          %1403 = vst [vmem:[%s1304 + $0x10] sm:$0xff] %v1371
          %1404 = vst [vmem:[%s1304 + $0x18] sm:$0xff] %v1372
          %1405 = vst [vmem:[%s1304 + $0x20] sm:$0xff] %v1373
          %1406 = vst [vmem:[%s1304 + $0x28] sm:$0xff] %v1374
          %1407 = vst [vmem:[%s1304 + $0x30] sm:$0xff] %v1375
          %1408 = vst [vmem:[%s1304 + $0x38] sm:$0xff] %v1376
          %1409 = vst [vmem:[%s1304 + $0x40] sm:$0xff] %v1377
          %1410 = vst [vmem:[%s1304 + $0x48] sm:$0xff] %v1378
          %1411 = vst [vmem:[%s1304 + $0x50] sm:$0xff] %v1379
          %1412 = vst [vmem:[%s1304 + $0x58] sm:$0xff] %v1380
          %1413 = vst [vmem:[%s1304 + $0x60] sm:$0xff] %v1381
          %1414 = vst [vmem:[%s1304 + $0x68] sm:$0xff] %v1382
          %1415 = vst [vmem:[%s1304 + $0x70] sm:$0xff] %v1383
          %1416 = vst [vmem:[%s1304 + $0x78] sm:$0xff] %v1384
          %1417 = vst [vmem:[%s1304 + $0x80] sm:$0xff] %v1385
          %1418 = vst [vmem:[%s1304 + $0x88] sm:$0xff] %v1386
          %1419 = vst [vmem:[%s1304 + $0x90] sm:$0xff] %v1387
          %1420 = vst [vmem:[%s1304 + $0x98] sm:$0xff] %v1388
          %1421 = vst [vmem:[%s1304 + $0xa0] sm:$0xff] %v1389
          %1422 = vst [vmem:[%s1304 + $0xa8] sm:$0xff] %v1390
          %1423 = vst [vmem:[%s1304 + $0xb0] sm:$0xff] %v1391
          %1424 = vst [vmem:[%s1304 + $0xb8] sm:$0xff] %v1392
          %1425 = vst [vmem:[%s1304 + $0xc0] sm:$0xff] %v1393
          %1426 = vst [vmem:[%s1304 + $0xc8] sm:$0xff] %v1394
          %1427 = vst [vmem:[%s1304 + $0xd0] sm:$0xff] %v1395
          %1428 = vst [vmem:[%s1304 + $0xd8] sm:$0xff] %v1396
          %1429 = vst [vmem:[%s1304 + $0xe0] sm:$0xff] %v1397
          %1430 = vst [vmem:[%s1304 + $0xe8] sm:$0xff] %v1398
          %1431 = vst [vmem:[%s1304 + $0xf0] sm:$0xff] %v1399
          %1432 = vst [vmem:[%s1304 + $0xf8] sm:$0xff] %v1400
        $region60: #{tpu_custom_call.1} parent=23 // pred_fallthru
          _
        %p1433 = scmp.eq.s32.totalorder %s27, 1
        %p1434 = pnand %p1433, %p1235
        %p1435 = pneg %p1434
        // Predicated region
        $region61: #{tpu_custom_call.1} parent=23 // pred_check
          _
        $region62: #{tpu_custom_call.1} parent=23 // pred_check_branch
          %1437 = sbr.rel (%p1434) target = $region64
        $region63: #{tpu_custom_call.1} parent=23 // pred_region
          %v1438 = vld [vmem:[#allocation12] sm:$0xff]
          %v1439 = vld [vmem:[#allocation12 + $0x8] sm:$0xff]
          %v1440 = vld [vmem:[#allocation12 + $0x10] sm:$0xff]
          %v1441 = vld [vmem:[#allocation12 + $0x18] sm:$0xff]
          %v1442 = vld [vmem:[#allocation12 + $0x20] sm:$0xff]
          %v1443 = vld [vmem:[#allocation12 + $0x28] sm:$0xff]
          %v1444 = vld [vmem:[#allocation12 + $0x30] sm:$0xff]
          %v1445 = vld [vmem:[#allocation12 + $0x38] sm:$0xff]
          %v1446 = vld [vmem:[#allocation12 + $0x40] sm:$0xff]
          %v1447 = vld [vmem:[#allocation12 + $0x48] sm:$0xff]
          %v1448 = vld [vmem:[#allocation12 + $0x50] sm:$0xff]
          %v1449 = vld [vmem:[#allocation12 + $0x58] sm:$0xff]
          %v1450 = vld [vmem:[#allocation12 + $0x60] sm:$0xff]
          %v1451 = vld [vmem:[#allocation12 + $0x68] sm:$0xff]
          %v1452 = vld [vmem:[#allocation12 + $0x70] sm:$0xff]
          %v1453 = vld [vmem:[#allocation12 + $0x78] sm:$0xff]
          %v1454 = vld [vmem:[#allocation12 + $0x80] sm:$0xff]
          %v1455 = vld [vmem:[#allocation12 + $0x88] sm:$0xff]
          %v1456 = vld [vmem:[#allocation12 + $0x90] sm:$0xff]
          %v1457 = vld [vmem:[#allocation12 + $0x98] sm:$0xff]
          %v1458 = vld [vmem:[#allocation12 + $0xa0] sm:$0xff]
          %v1459 = vld [vmem:[#allocation12 + $0xa8] sm:$0xff]
          %v1460 = vld [vmem:[#allocation12 + $0xb0] sm:$0xff]
          %v1461 = vld [vmem:[#allocation12 + $0xb8] sm:$0xff]
          %v1462 = vld [vmem:[#allocation12 + $0xc0] sm:$0xff]
          %v1463 = vld [vmem:[#allocation12 + $0xc8] sm:$0xff]
          %v1464 = vld [vmem:[#allocation12 + $0xd0] sm:$0xff]
          %v1465 = vld [vmem:[#allocation12 + $0xd8] sm:$0xff]
          %v1466 = vld [vmem:[#allocation12 + $0xe0] sm:$0xff]
          %v1467 = vld [vmem:[#allocation12 + $0xe8] sm:$0xff]
          %v1468 = vld [vmem:[#allocation12 + $0xf0] sm:$0xff]
          %v1469 = vld [vmem:[#allocation12 + $0xf8] sm:$0xff]
          %v1470 = vld [vmem:[#allocation12 + $0x100] sm:$0xff]
          %v1471 = vld [vmem:[#allocation12 + $0x108] sm:$0xff]
          %v1472 = vld [vmem:[#allocation12 + $0x110] sm:$0xff]
          %v1473 = vld [vmem:[#allocation12 + $0x118] sm:$0xff]
          %v1474 = vld [vmem:[#allocation12 + $0x120] sm:$0xff]
          %v1475 = vld [vmem:[#allocation12 + $0x128] sm:$0xff]
          %v1476 = vld [vmem:[#allocation12 + $0x130] sm:$0xff]
          %v1477 = vld [vmem:[#allocation12 + $0x138] sm:$0xff]
          %v1478 = vld [vmem:[#allocation12 + $0x140] sm:$0xff]
          %v1479 = vld [vmem:[#allocation12 + $0x148] sm:$0xff]
          %v1480 = vld [vmem:[#allocation12 + $0x150] sm:$0xff]
          %v1481 = vld [vmem:[#allocation12 + $0x158] sm:$0xff]
          %v1482 = vld [vmem:[#allocation12 + $0x160] sm:$0xff]
          %v1483 = vld [vmem:[#allocation12 + $0x168] sm:$0xff]
          %v1484 = vld [vmem:[#allocation12 + $0x170] sm:$0xff]
          %v1485 = vld [vmem:[#allocation12 + $0x178] sm:$0xff]
          %v1486 = vld [vmem:[#allocation12 + $0x180] sm:$0xff]
          %v1487 = vld [vmem:[#allocation12 + $0x188] sm:$0xff]
          %v1488 = vld [vmem:[#allocation12 + $0x190] sm:$0xff]
          %v1489 = vld [vmem:[#allocation12 + $0x198] sm:$0xff]
          %v1490 = vld [vmem:[#allocation12 + $0x1a0] sm:$0xff]
          %v1491 = vld [vmem:[#allocation12 + $0x1a8] sm:$0xff]
          %v1492 = vld [vmem:[#allocation12 + $0x1b0] sm:$0xff]
          %v1493 = vld [vmem:[#allocation12 + $0x1b8] sm:$0xff]
          %v1494 = vld [vmem:[#allocation12 + $0x1c0] sm:$0xff]
          %v1495 = vld [vmem:[#allocation12 + $0x1c8] sm:$0xff]
          %v1496 = vld [vmem:[#allocation12 + $0x1d0] sm:$0xff]
          %v1497 = vld [vmem:[#allocation12 + $0x1d8] sm:$0xff]
          %v1498 = vld [vmem:[#allocation12 + $0x1e0] sm:$0xff]
          %v1499 = vld [vmem:[#allocation12 + $0x1e8] sm:$0xff]
          %v1500 = vld [vmem:[#allocation12 + $0x1f0] sm:$0xff]
          %v1501 = vld [vmem:[#allocation12 + $0x1f8] sm:$0xff]
          %v1502 = vld [vmem:[#allocation5] sm:$0xff]
          %v1503 = vld [vmem:[#allocation5 + $0x8] sm:$0xff]
          %v1504 = vld [vmem:[#allocation5 + $0x10] sm:$0xff]
          %v1505 = vld [vmem:[#allocation5 + $0x18] sm:$0xff]
          %v1506 = vld [vmem:[#allocation5 + $0x20] sm:$0xff]
          %v1507 = vld [vmem:[#allocation5 + $0x28] sm:$0xff]
          %v1508 = vld [vmem:[#allocation5 + $0x30] sm:$0xff]
          %v1509 = vld [vmem:[#allocation5 + $0x38] sm:$0xff]
          %v1510 = vld [vmem:[#allocation5 + $0x40] sm:$0xff]
          %v1511 = vld [vmem:[#allocation5 + $0x48] sm:$0xff]
          %v1512 = vld [vmem:[#allocation5 + $0x50] sm:$0xff]
          %v1513 = vld [vmem:[#allocation5 + $0x58] sm:$0xff]
          %v1514 = vld [vmem:[#allocation5 + $0x60] sm:$0xff]
          %v1515 = vld [vmem:[#allocation5 + $0x68] sm:$0xff]
          %v1516 = vld [vmem:[#allocation5 + $0x70] sm:$0xff]
          %v1517 = vld [vmem:[#allocation5 + $0x78] sm:$0xff]
          %v1518 = vld [vmem:[#allocation5 + $0x80] sm:$0xff]
          %v1519 = vld [vmem:[#allocation5 + $0x88] sm:$0xff]
          %v1520 = vld [vmem:[#allocation5 + $0x90] sm:$0xff]
          %v1521 = vld [vmem:[#allocation5 + $0x98] sm:$0xff]
          %v1522 = vld [vmem:[#allocation5 + $0xa0] sm:$0xff]
          %v1523 = vld [vmem:[#allocation5 + $0xa8] sm:$0xff]
          %v1524 = vld [vmem:[#allocation5 + $0xb0] sm:$0xff]
          %v1525 = vld [vmem:[#allocation5 + $0xb8] sm:$0xff]
          %v1526 = vld [vmem:[#allocation5 + $0xc0] sm:$0xff]
          %v1527 = vld [vmem:[#allocation5 + $0xc8] sm:$0xff]
          %v1528 = vld [vmem:[#allocation5 + $0xd0] sm:$0xff]
          %v1529 = vld [vmem:[#allocation5 + $0xd8] sm:$0xff]
          %v1530 = vld [vmem:[#allocation5 + $0xe0] sm:$0xff]
          %v1531 = vld [vmem:[#allocation5 + $0xe8] sm:$0xff]
          %v1532 = vld [vmem:[#allocation5 + $0xf0] sm:$0xff]
          %v1533 = vld [vmem:[#allocation5 + $0xf8] sm:$0xff]
          %v1534 = vld [vmem:[#allocation5 + $0x100] sm:$0xff]
          %v1535 = vld [vmem:[#allocation5 + $0x108] sm:$0xff]
          %v1536 = vld [vmem:[#allocation5 + $0x110] sm:$0xff]
          %v1537 = vld [vmem:[#allocation5 + $0x118] sm:$0xff]
          %v1538 = vld [vmem:[#allocation5 + $0x120] sm:$0xff]
          %v1539 = vld [vmem:[#allocation5 + $0x128] sm:$0xff]
          %v1540 = vld [vmem:[#allocation5 + $0x130] sm:$0xff]
          %v1541 = vld [vmem:[#allocation5 + $0x138] sm:$0xff]
          %v1542 = vld [vmem:[#allocation5 + $0x140] sm:$0xff]
          %v1543 = vld [vmem:[#allocation5 + $0x148] sm:$0xff]
          %v1544 = vld [vmem:[#allocation5 + $0x150] sm:$0xff]
          %v1545 = vld [vmem:[#allocation5 + $0x158] sm:$0xff]
          %v1546 = vld [vmem:[#allocation5 + $0x160] sm:$0xff]
          %v1547 = vld [vmem:[#allocation5 + $0x168] sm:$0xff]
          %v1548 = vld [vmem:[#allocation5 + $0x170] sm:$0xff]
          %v1549 = vld [vmem:[#allocation5 + $0x178] sm:$0xff]
          %v1550 = vld [vmem:[#allocation5 + $0x180] sm:$0xff]
          %v1551 = vld [vmem:[#allocation5 + $0x188] sm:$0xff]
          %v1552 = vld [vmem:[#allocation5 + $0x190] sm:$0xff]
          %v1553 = vld [vmem:[#allocation5 + $0x198] sm:$0xff]
          %v1554 = vld [vmem:[#allocation5 + $0x1a0] sm:$0xff]
          %v1555 = vld [vmem:[#allocation5 + $0x1a8] sm:$0xff]
          %v1556 = vld [vmem:[#allocation5 + $0x1b0] sm:$0xff]
          %v1557 = vld [vmem:[#allocation5 + $0x1b8] sm:$0xff]
          %v1558 = vld [vmem:[#allocation5 + $0x1c0] sm:$0xff]
          %v1559 = vld [vmem:[#allocation5 + $0x1c8] sm:$0xff]
          %v1560 = vld [vmem:[#allocation5 + $0x1d0] sm:$0xff]
          %v1561 = vld [vmem:[#allocation5 + $0x1d8] sm:$0xff]
          %v1562 = vld [vmem:[#allocation5 + $0x1e0] sm:$0xff]
          %v1563 = vld [vmem:[#allocation5 + $0x1e8] sm:$0xff]
          %v1564 = vld [vmem:[#allocation5 + $0x1f0] sm:$0xff]
          %v1565 = vld [vmem:[#allocation5 + $0x1f8] sm:$0xff]
          %v1566 = vadd.f32 %v1438, %v1502
          %v1567 = vadd.f32 %v1439, %v1503
          %v1568 = vadd.f32 %v1440, %v1504
          %v1569 = vadd.f32 %v1441, %v1505
          %v1570 = vadd.f32 %v1442, %v1506
          %v1571 = vadd.f32 %v1443, %v1507
          %v1572 = vadd.f32 %v1444, %v1508
          %v1573 = vadd.f32 %v1445, %v1509
          %v1574 = vadd.f32 %v1446, %v1510
          %v1575 = vadd.f32 %v1447, %v1511
          %v1576 = vadd.f32 %v1448, %v1512
          %v1577 = vadd.f32 %v1449, %v1513
          %v1578 = vadd.f32 %v1450, %v1514
          %v1579 = vadd.f32 %v1451, %v1515
          %v1580 = vadd.f32 %v1452, %v1516
          %v1581 = vadd.f32 %v1453, %v1517
          %v1582 = vadd.f32 %v1454, %v1518
          %v1583 = vadd.f32 %v1455, %v1519
          %v1584 = vadd.f32 %v1456, %v1520
          %v1585 = vadd.f32 %v1457, %v1521
          %v1586 = vadd.f32 %v1458, %v1522
          %v1587 = vadd.f32 %v1459, %v1523
          %v1588 = vadd.f32 %v1460, %v1524
          %v1589 = vadd.f32 %v1461, %v1525
          %v1590 = vadd.f32 %v1462, %v1526
          %v1591 = vadd.f32 %v1463, %v1527
          %v1592 = vadd.f32 %v1464, %v1528
          %v1593 = vadd.f32 %v1465, %v1529
          %v1594 = vadd.f32 %v1466, %v1530
          %v1595 = vadd.f32 %v1467, %v1531
          %v1596 = vadd.f32 %v1468, %v1532
          %v1597 = vadd.f32 %v1469, %v1533
          %v1598 = vadd.f32 %v1470, %v1534
          %v1599 = vadd.f32 %v1471, %v1535
          %v1600 = vadd.f32 %v1472, %v1536
          %v1601 = vadd.f32 %v1473, %v1537
          %v1602 = vadd.f32 %v1474, %v1538
          %v1603 = vadd.f32 %v1475, %v1539
          %v1604 = vadd.f32 %v1476, %v1540
          %v1605 = vadd.f32 %v1477, %v1541
          %v1606 = vadd.f32 %v1478, %v1542
          %v1607 = vadd.f32 %v1479, %v1543
          %v1608 = vadd.f32 %v1480, %v1544
          %v1609 = vadd.f32 %v1481, %v1545
          %v1610 = vadd.f32 %v1482, %v1546
          %v1611 = vadd.f32 %v1483, %v1547
          %v1612 = vadd.f32 %v1484, %v1548
          %v1613 = vadd.f32 %v1485, %v1549
          %v1614 = vadd.f32 %v1486, %v1550
          %v1615 = vadd.f32 %v1487, %v1551
          %v1616 = vadd.f32 %v1488, %v1552
          %v1617 = vadd.f32 %v1489, %v1553
          %v1618 = vadd.f32 %v1490, %v1554
          %v1619 = vadd.f32 %v1491, %v1555
          %v1620 = vadd.f32 %v1492, %v1556
          %v1621 = vadd.f32 %v1493, %v1557
          %v1622 = vadd.f32 %v1494, %v1558
          %v1623 = vadd.f32 %v1495, %v1559
          %v1624 = vadd.f32 %v1496, %v1560
          %v1625 = vadd.f32 %v1497, %v1561
          %v1626 = vadd.f32 %v1498, %v1562
          %v1627 = vadd.f32 %v1499, %v1563
          %v1628 = vadd.f32 %v1500, %v1564
          %v1629 = vadd.f32 %v1501, %v1565
          %1630 = vst [vmem:[#allocation12] sm:$0xff] %v1566
          %1631 = vst [vmem:[#allocation12 + $0x8] sm:$0xff] %v1567
          %1632 = vst [vmem:[#allocation12 + $0x10] sm:$0xff] %v1568
          %1633 = vst [vmem:[#allocation12 + $0x18] sm:$0xff] %v1569
          %1634 = vst [vmem:[#allocation12 + $0x20] sm:$0xff] %v1570
          %1635 = vst [vmem:[#allocation12 + $0x28] sm:$0xff] %v1571
          %1636 = vst [vmem:[#allocation12 + $0x30] sm:$0xff] %v1572
          %1637 = vst [vmem:[#allocation12 + $0x38] sm:$0xff] %v1573
          %1638 = vst [vmem:[#allocation12 + $0x40] sm:$0xff] %v1574
          %1639 = vst [vmem:[#allocation12 + $0x48] sm:$0xff] %v1575
          %1640 = vst [vmem:[#allocation12 + $0x50] sm:$0xff] %v1576
          %1641 = vst [vmem:[#allocation12 + $0x58] sm:$0xff] %v1577
          %1642 = vst [vmem:[#allocation12 + $0x60] sm:$0xff] %v1578
          %1643 = vst [vmem:[#allocation12 + $0x68] sm:$0xff] %v1579
          %1644 = vst [vmem:[#allocation12 + $0x70] sm:$0xff] %v1580
          %1645 = vst [vmem:[#allocation12 + $0x78] sm:$0xff] %v1581
          %1646 = vst [vmem:[#allocation12 + $0x80] sm:$0xff] %v1582
          %1647 = vst [vmem:[#allocation12 + $0x88] sm:$0xff] %v1583
          %1648 = vst [vmem:[#allocation12 + $0x90] sm:$0xff] %v1584
          %1649 = vst [vmem:[#allocation12 + $0x98] sm:$0xff] %v1585
          %1650 = vst [vmem:[#allocation12 + $0xa0] sm:$0xff] %v1586
          %1651 = vst [vmem:[#allocation12 + $0xa8] sm:$0xff] %v1587
          %1652 = vst [vmem:[#allocation12 + $0xb0] sm:$0xff] %v1588
          %1653 = vst [vmem:[#allocation12 + $0xb8] sm:$0xff] %v1589
          %1654 = vst [vmem:[#allocation12 + $0xc0] sm:$0xff] %v1590
          %1655 = vst [vmem:[#allocation12 + $0xc8] sm:$0xff] %v1591
          %1656 = vst [vmem:[#allocation12 + $0xd0] sm:$0xff] %v1592
          %1657 = vst [vmem:[#allocation12 + $0xd8] sm:$0xff] %v1593
          %1658 = vst [vmem:[#allocation12 + $0xe0] sm:$0xff] %v1594
          %1659 = vst [vmem:[#allocation12 + $0xe8] sm:$0xff] %v1595
          %1660 = vst [vmem:[#allocation12 + $0xf0] sm:$0xff] %v1596
          %1661 = vst [vmem:[#allocation12 + $0xf8] sm:$0xff] %v1597
          %1662 = vst [vmem:[#allocation12 + $0x100] sm:$0xff] %v1598
          %1663 = vst [vmem:[#allocation12 + $0x108] sm:$0xff] %v1599
          %1664 = vst [vmem:[#allocation12 + $0x110] sm:$0xff] %v1600
          %1665 = vst [vmem:[#allocation12 + $0x118] sm:$0xff] %v1601
          %1666 = vst [vmem:[#allocation12 + $0x120] sm:$0xff] %v1602
          %1667 = vst [vmem:[#allocation12 + $0x128] sm:$0xff] %v1603
          %1668 = vst [vmem:[#allocation12 + $0x130] sm:$0xff] %v1604
          %1669 = vst [vmem:[#allocation12 + $0x138] sm:$0xff] %v1605
          %1670 = vst [vmem:[#allocation12 + $0x140] sm:$0xff] %v1606
          %1671 = vst [vmem:[#allocation12 + $0x148] sm:$0xff] %v1607
          %1672 = vst [vmem:[#allocation12 + $0x150] sm:$0xff] %v1608
          %1673 = vst [vmem:[#allocation12 + $0x158] sm:$0xff] %v1609
          %1674 = vst [vmem:[#allocation12 + $0x160] sm:$0xff] %v1610
          %1675 = vst [vmem:[#allocation12 + $0x168] sm:$0xff] %v1611
          %1676 = vst [vmem:[#allocation12 + $0x170] sm:$0xff] %v1612
          %1677 = vst [vmem:[#allocation12 + $0x178] sm:$0xff] %v1613
          %1678 = vst [vmem:[#allocation12 + $0x180] sm:$0xff] %v1614
          %1679 = vst [vmem:[#allocation12 + $0x188] sm:$0xff] %v1615
          %1680 = vst [vmem:[#allocation12 + $0x190] sm:$0xff] %v1616
          %1681 = vst [vmem:[#allocation12 + $0x198] sm:$0xff] %v1617
          %1682 = vst [vmem:[#allocation12 + $0x1a0] sm:$0xff] %v1618
          %1683 = vst [vmem:[#allocation12 + $0x1a8] sm:$0xff] %v1619
          %1684 = vst [vmem:[#allocation12 + $0x1b0] sm:$0xff] %v1620
          %1685 = vst [vmem:[#allocation12 + $0x1b8] sm:$0xff] %v1621
          %1686 = vst [vmem:[#allocation12 + $0x1c0] sm:$0xff] %v1622
          %1687 = vst [vmem:[#allocation12 + $0x1c8] sm:$0xff] %v1623
          %1688 = vst [vmem:[#allocation12 + $0x1d0] sm:$0xff] %v1624
          %1689 = vst [vmem:[#allocation12 + $0x1d8] sm:$0xff] %v1625
          %1690 = vst [vmem:[#allocation12 + $0x1e0] sm:$0xff] %v1626
          %1691 = vst [vmem:[#allocation12 + $0x1e8] sm:$0xff] %v1627
          %1692 = vst [vmem:[#allocation12 + $0x1f0] sm:$0xff] %v1628
          %1693 = vst [vmem:[#allocation12 + $0x1f8] sm:$0xff] %v1629
          %v1694 = vld [vmem:[#allocation4] sm:$0xff]
          %v1695 = vld [vmem:[#allocation4 + $0x8] sm:$0xff]
          %v1696 = vld [vmem:[#allocation4 + $0x10] sm:$0xff]
          %v1697 = vld [vmem:[#allocation4 + $0x18] sm:$0xff]
          %v1698 = vld [vmem:[#allocation4 + $0x20] sm:$0xff]
          %v1699 = vld [vmem:[#allocation4 + $0x28] sm:$0xff]
          %v1700 = vld [vmem:[#allocation4 + $0x30] sm:$0xff]
          %v1701 = vld [vmem:[#allocation4 + $0x38] sm:$0xff]
          %v1702 = vld [vmem:[#allocation4 + $0x40] sm:$0xff]
          %v1703 = vld [vmem:[#allocation4 + $0x48] sm:$0xff]
          %v1704 = vld [vmem:[#allocation4 + $0x50] sm:$0xff]
          %v1705 = vld [vmem:[#allocation4 + $0x58] sm:$0xff]
          %v1706 = vld [vmem:[#allocation4 + $0x60] sm:$0xff]
          %v1707 = vld [vmem:[#allocation4 + $0x68] sm:$0xff]
          %v1708 = vld [vmem:[#allocation4 + $0x70] sm:$0xff]
          %v1709 = vld [vmem:[#allocation4 + $0x78] sm:$0xff]
          %v1710 = vld [vmem:[#allocation4 + $0x80] sm:$0xff]
          %v1711 = vld [vmem:[#allocation4 + $0x88] sm:$0xff]
          %v1712 = vld [vmem:[#allocation4 + $0x90] sm:$0xff]
          %v1713 = vld [vmem:[#allocation4 + $0x98] sm:$0xff]
          %v1714 = vld [vmem:[#allocation4 + $0xa0] sm:$0xff]
          %v1715 = vld [vmem:[#allocation4 + $0xa8] sm:$0xff]
          %v1716 = vld [vmem:[#allocation4 + $0xb0] sm:$0xff]
          %v1717 = vld [vmem:[#allocation4 + $0xb8] sm:$0xff]
          %v1718 = vld [vmem:[#allocation4 + $0xc0] sm:$0xff]
          %v1719 = vld [vmem:[#allocation4 + $0xc8] sm:$0xff]
          %v1720 = vld [vmem:[#allocation4 + $0xd0] sm:$0xff]
          %v1721 = vld [vmem:[#allocation4 + $0xd8] sm:$0xff]
          %v1722 = vld [vmem:[#allocation4 + $0xe0] sm:$0xff]
          %v1723 = vld [vmem:[#allocation4 + $0xe8] sm:$0xff]
          %v1724 = vld [vmem:[#allocation4 + $0xf0] sm:$0xff]
          %v1725 = vld [vmem:[#allocation4 + $0xf8] sm:$0xff]
          %v1726 = vld [vmem:[#allocation4 + $0x100] sm:$0xff]
          %v1727 = vld [vmem:[#allocation4 + $0x108] sm:$0xff]
          %v1728 = vld [vmem:[#allocation4 + $0x110] sm:$0xff]
          %v1729 = vld [vmem:[#allocation4 + $0x118] sm:$0xff]
          %v1730 = vld [vmem:[#allocation4 + $0x120] sm:$0xff]
          %v1731 = vld [vmem:[#allocation4 + $0x128] sm:$0xff]
          %v1732 = vld [vmem:[#allocation4 + $0x130] sm:$0xff]
          %v1733 = vld [vmem:[#allocation4 + $0x138] sm:$0xff]
          %v1734 = vld [vmem:[#allocation4 + $0x140] sm:$0xff]
          %v1735 = vld [vmem:[#allocation4 + $0x148] sm:$0xff]
          %v1736 = vld [vmem:[#allocation4 + $0x150] sm:$0xff]
          %v1737 = vld [vmem:[#allocation4 + $0x158] sm:$0xff]
          %v1738 = vld [vmem:[#allocation4 + $0x160] sm:$0xff]
          %v1739 = vld [vmem:[#allocation4 + $0x168] sm:$0xff]
          %v1740 = vld [vmem:[#allocation4 + $0x170] sm:$0xff]
          %v1741 = vld [vmem:[#allocation4 + $0x178] sm:$0xff]
          %v1742 = vld [vmem:[#allocation4 + $0x180] sm:$0xff]
          %v1743 = vld [vmem:[#allocation4 + $0x188] sm:$0xff]
          %v1744 = vld [vmem:[#allocation4 + $0x190] sm:$0xff]
          %v1745 = vld [vmem:[#allocation4 + $0x198] sm:$0xff]
          %v1746 = vld [vmem:[#allocation4 + $0x1a0] sm:$0xff]
          %v1747 = vld [vmem:[#allocation4 + $0x1a8] sm:$0xff]
          %v1748 = vld [vmem:[#allocation4 + $0x1b0] sm:$0xff]
          %v1749 = vld [vmem:[#allocation4 + $0x1b8] sm:$0xff]
          %v1750 = vld [vmem:[#allocation4 + $0x1c0] sm:$0xff]
          %v1751 = vld [vmem:[#allocation4 + $0x1c8] sm:$0xff]
          %v1752 = vld [vmem:[#allocation4 + $0x1d0] sm:$0xff]
          %v1753 = vld [vmem:[#allocation4 + $0x1d8] sm:$0xff]
          %v1754 = vld [vmem:[#allocation4 + $0x1e0] sm:$0xff]
          %v1755 = vld [vmem:[#allocation4 + $0x1e8] sm:$0xff]
          %v1756 = vld [vmem:[#allocation4 + $0x1f0] sm:$0xff]
          %v1757 = vld [vmem:[#allocation4 + $0x1f8] sm:$0xff]
          %v1758 = vpack.c.bf16 %v1695, %v1694
          %v1759 = vpack.c.bf16 %v1697, %v1696
          %v1760 = vpack.c.bf16 %v1699, %v1698
          %v1761 = vpack.c.bf16 %v1701, %v1700
          %v1762 = vpack.c.bf16 %v1703, %v1702
          %v1763 = vpack.c.bf16 %v1705, %v1704
          %v1764 = vpack.c.bf16 %v1707, %v1706
          %v1765 = vpack.c.bf16 %v1709, %v1708
          %v1766 = vpack.c.bf16 %v1711, %v1710
          %v1767 = vpack.c.bf16 %v1713, %v1712
          %v1768 = vpack.c.bf16 %v1715, %v1714
          %v1769 = vpack.c.bf16 %v1717, %v1716
          %v1770 = vpack.c.bf16 %v1719, %v1718
          %v1771 = vpack.c.bf16 %v1721, %v1720
          %v1772 = vpack.c.bf16 %v1723, %v1722
          %v1773 = vpack.c.bf16 %v1725, %v1724
          %v1774 = vpack.c.bf16 %v1727, %v1726
          %v1775 = vpack.c.bf16 %v1729, %v1728
          %v1776 = vpack.c.bf16 %v1731, %v1730
          %v1777 = vpack.c.bf16 %v1733, %v1732
          %v1778 = vpack.c.bf16 %v1735, %v1734
          %v1779 = vpack.c.bf16 %v1737, %v1736
          %v1780 = vpack.c.bf16 %v1739, %v1738
          %v1781 = vpack.c.bf16 %v1741, %v1740
          %v1782 = vpack.c.bf16 %v1743, %v1742
          %v1783 = vpack.c.bf16 %v1745, %v1744
          %v1784 = vpack.c.bf16 %v1747, %v1746
          %v1785 = vpack.c.bf16 %v1749, %v1748
          %v1786 = vpack.c.bf16 %v1751, %v1750
          %v1787 = vpack.c.bf16 %v1753, %v1752
          %v1788 = vpack.c.bf16 %v1755, %v1754
          %v1789 = vpack.c.bf16 %v1757, %v1756
          %1790 = vst [vmem:[#allocation2] sm:$0xff] %v1758
          %1791 = vst [vmem:[#allocation2 + $0x8] sm:$0xff] %v1759
          %1792 = vst [vmem:[#allocation2 + $0x10] sm:$0xff] %v1760
          %1793 = vst [vmem:[#allocation2 + $0x18] sm:$0xff] %v1761
          %1794 = vst [vmem:[#allocation2 + $0x20] sm:$0xff] %v1762
          %1795 = vst [vmem:[#allocation2 + $0x28] sm:$0xff] %v1763
          %1796 = vst [vmem:[#allocation2 + $0x30] sm:$0xff] %v1764
          %1797 = vst [vmem:[#allocation2 + $0x38] sm:$0xff] %v1765
          %1798 = vst [vmem:[#allocation2 + $0x40] sm:$0xff] %v1766
          %1799 = vst [vmem:[#allocation2 + $0x48] sm:$0xff] %v1767
          %1800 = vst [vmem:[#allocation2 + $0x50] sm:$0xff] %v1768
          %1801 = vst [vmem:[#allocation2 + $0x58] sm:$0xff] %v1769
          %1802 = vst [vmem:[#allocation2 + $0x60] sm:$0xff] %v1770
          %1803 = vst [vmem:[#allocation2 + $0x68] sm:$0xff] %v1771
          %1804 = vst [vmem:[#allocation2 + $0x70] sm:$0xff] %v1772
          %1805 = vst [vmem:[#allocation2 + $0x78] sm:$0xff] %v1773
          %1806 = vst [vmem:[#allocation2 + $0x80] sm:$0xff] %v1774
          %1807 = vst [vmem:[#allocation2 + $0x88] sm:$0xff] %v1775
          %1808 = vst [vmem:[#allocation2 + $0x90] sm:$0xff] %v1776
          %1809 = vst [vmem:[#allocation2 + $0x98] sm:$0xff] %v1777
          %1810 = vst [vmem:[#allocation2 + $0xa0] sm:$0xff] %v1778
          %1811 = vst [vmem:[#allocation2 + $0xa8] sm:$0xff] %v1779
          %1812 = vst [vmem:[#allocation2 + $0xb0] sm:$0xff] %v1780
          %1813 = vst [vmem:[#allocation2 + $0xb8] sm:$0xff] %v1781
          %1814 = vst [vmem:[#allocation2 + $0xc0] sm:$0xff] %v1782
          %1815 = vst [vmem:[#allocation2 + $0xc8] sm:$0xff] %v1783
          %1816 = vst [vmem:[#allocation2 + $0xd0] sm:$0xff] %v1784
          %1817 = vst [vmem:[#allocation2 + $0xd8] sm:$0xff] %v1785
          %1818 = vst [vmem:[#allocation2 + $0xe0] sm:$0xff] %v1786
          %1819 = vst [vmem:[#allocation2 + $0xe8] sm:$0xff] %v1787
          %1820 = vst [vmem:[#allocation2 + $0xf0] sm:$0xff] %v1788
          %1821 = vst [vmem:[#allocation2 + $0xf8] sm:$0xff] %v1789
          %v1822 = vld [vmem:[#allocation5] sm:$0xff]
          %v1823 = vld [vmem:[#allocation5 + $0x8] sm:$0xff]
          %v1824 = vld [vmem:[#allocation5 + $0x10] sm:$0xff]
          %v1825 = vld [vmem:[#allocation5 + $0x18] sm:$0xff]
          %v1826 = vld [vmem:[#allocation5 + $0x20] sm:$0xff]
          %v1827 = vld [vmem:[#allocation5 + $0x28] sm:$0xff]
          %v1828 = vld [vmem:[#allocation5 + $0x30] sm:$0xff]
          %v1829 = vld [vmem:[#allocation5 + $0x38] sm:$0xff]
          %v1830 = vld [vmem:[#allocation5 + $0x40] sm:$0xff]
          %v1831 = vld [vmem:[#allocation5 + $0x48] sm:$0xff]
          %v1832 = vld [vmem:[#allocation5 + $0x50] sm:$0xff]
          %v1833 = vld [vmem:[#allocation5 + $0x58] sm:$0xff]
          %v1834 = vld [vmem:[#allocation5 + $0x60] sm:$0xff]
          %v1835 = vld [vmem:[#allocation5 + $0x68] sm:$0xff]
          %v1836 = vld [vmem:[#allocation5 + $0x70] sm:$0xff]
          %v1837 = vld [vmem:[#allocation5 + $0x78] sm:$0xff]
          %v1838 = vld [vmem:[#allocation5 + $0x80] sm:$0xff]
          %v1839 = vld [vmem:[#allocation5 + $0x88] sm:$0xff]
          %v1840 = vld [vmem:[#allocation5 + $0x90] sm:$0xff]
          %v1841 = vld [vmem:[#allocation5 + $0x98] sm:$0xff]
          %v1842 = vld [vmem:[#allocation5 + $0xa0] sm:$0xff]
          %v1843 = vld [vmem:[#allocation5 + $0xa8] sm:$0xff]
          %v1844 = vld [vmem:[#allocation5 + $0xb0] sm:$0xff]
          %v1845 = vld [vmem:[#allocation5 + $0xb8] sm:$0xff]
          %v1846 = vld [vmem:[#allocation5 + $0xc0] sm:$0xff]
          %v1847 = vld [vmem:[#allocation5 + $0xc8] sm:$0xff]
          %v1848 = vld [vmem:[#allocation5 + $0xd0] sm:$0xff]
          %v1849 = vld [vmem:[#allocation5 + $0xd8] sm:$0xff]
          %v1850 = vld [vmem:[#allocation5 + $0xe0] sm:$0xff]
          %v1851 = vld [vmem:[#allocation5 + $0xe8] sm:$0xff]
          %v1852 = vld [vmem:[#allocation5 + $0xf0] sm:$0xff]
          %v1853 = vld [vmem:[#allocation5 + $0xf8] sm:$0xff]
          %v1854 = vld [vmem:[#allocation5 + $0x100] sm:$0xff]
          %v1855 = vld [vmem:[#allocation5 + $0x108] sm:$0xff]
          %v1856 = vld [vmem:[#allocation5 + $0x110] sm:$0xff]
          %v1857 = vld [vmem:[#allocation5 + $0x118] sm:$0xff]
          %v1858 = vld [vmem:[#allocation5 + $0x120] sm:$0xff]
          %v1859 = vld [vmem:[#allocation5 + $0x128] sm:$0xff]
          %v1860 = vld [vmem:[#allocation5 + $0x130] sm:$0xff]
          %v1861 = vld [vmem:[#allocation5 + $0x138] sm:$0xff]
          %v1862 = vld [vmem:[#allocation5 + $0x140] sm:$0xff]
          %v1863 = vld [vmem:[#allocation5 + $0x148] sm:$0xff]
          %v1864 = vld [vmem:[#allocation5 + $0x150] sm:$0xff]
          %v1865 = vld [vmem:[#allocation5 + $0x158] sm:$0xff]
          %v1866 = vld [vmem:[#allocation5 + $0x160] sm:$0xff]
          %v1867 = vld [vmem:[#allocation5 + $0x168] sm:$0xff]
          %v1868 = vld [vmem:[#allocation5 + $0x170] sm:$0xff]
          %v1869 = vld [vmem:[#allocation5 + $0x178] sm:$0xff]
          %v1870 = vld [vmem:[#allocation5 + $0x180] sm:$0xff]
          %v1871 = vld [vmem:[#allocation5 + $0x188] sm:$0xff]
          %v1872 = vld [vmem:[#allocation5 + $0x190] sm:$0xff]
          %v1873 = vld [vmem:[#allocation5 + $0x198] sm:$0xff]
          %v1874 = vld [vmem:[#allocation5 + $0x1a0] sm:$0xff]
          %v1875 = vld [vmem:[#allocation5 + $0x1a8] sm:$0xff]
          %v1876 = vld [vmem:[#allocation5 + $0x1b0] sm:$0xff]
          %v1877 = vld [vmem:[#allocation5 + $0x1b8] sm:$0xff]
          %v1878 = vld [vmem:[#allocation5 + $0x1c0] sm:$0xff]
          %v1879 = vld [vmem:[#allocation5 + $0x1c8] sm:$0xff]
          %v1880 = vld [vmem:[#allocation5 + $0x1d0] sm:$0xff]
          %v1881 = vld [vmem:[#allocation5 + $0x1d8] sm:$0xff]
          %v1882 = vld [vmem:[#allocation5 + $0x1e0] sm:$0xff]
          %v1883 = vld [vmem:[#allocation5 + $0x1e8] sm:$0xff]
          %v1884 = vld [vmem:[#allocation5 + $0x1f0] sm:$0xff]
          %v1885 = vld [vmem:[#allocation5 + $0x1f8] sm:$0xff]
          %v1886 = vpack.c.bf16 %v1823, %v1822
          %v1887 = vpack.c.bf16 %v1825, %v1824
          %v1888 = vpack.c.bf16 %v1827, %v1826
          %v1889 = vpack.c.bf16 %v1829, %v1828
          %v1890 = vpack.c.bf16 %v1831, %v1830
          %v1891 = vpack.c.bf16 %v1833, %v1832
          %v1892 = vpack.c.bf16 %v1835, %v1834
          %v1893 = vpack.c.bf16 %v1837, %v1836
          %v1894 = vpack.c.bf16 %v1839, %v1838
          %v1895 = vpack.c.bf16 %v1841, %v1840
          %v1896 = vpack.c.bf16 %v1843, %v1842
          %v1897 = vpack.c.bf16 %v1845, %v1844
          %v1898 = vpack.c.bf16 %v1847, %v1846
          %v1899 = vpack.c.bf16 %v1849, %v1848
          %v1900 = vpack.c.bf16 %v1851, %v1850
          %v1901 = vpack.c.bf16 %v1853, %v1852
          %v1902 = vpack.c.bf16 %v1855, %v1854
          %v1903 = vpack.c.bf16 %v1857, %v1856
          %v1904 = vpack.c.bf16 %v1859, %v1858
          %v1905 = vpack.c.bf16 %v1861, %v1860
          %v1906 = vpack.c.bf16 %v1863, %v1862
          %v1907 = vpack.c.bf16 %v1865, %v1864
          %v1908 = vpack.c.bf16 %v1867, %v1866
          %v1909 = vpack.c.bf16 %v1869, %v1868
          %v1910 = vpack.c.bf16 %v1871, %v1870
          %v1911 = vpack.c.bf16 %v1873, %v1872
          %v1912 = vpack.c.bf16 %v1875, %v1874
          %v1913 = vpack.c.bf16 %v1877, %v1876
          %v1914 = vpack.c.bf16 %v1879, %v1878
          %v1915 = vpack.c.bf16 %v1881, %v1880
          %v1916 = vpack.c.bf16 %v1883, %v1882
          %v1917 = vpack.c.bf16 %v1885, %v1884
          %1918 = vst [vmem:[#allocation3] sm:$0xff] %v1886
          %1919 = vst [vmem:[#allocation3 + $0x8] sm:$0xff] %v1887
          %1920 = vst [vmem:[#allocation3 + $0x10] sm:$0xff] %v1888
          %1921 = vst [vmem:[#allocation3 + $0x18] sm:$0xff] %v1889
          %1922 = vst [vmem:[#allocation3 + $0x20] sm:$0xff] %v1890
          %1923 = vst [vmem:[#allocation3 + $0x28] sm:$0xff] %v1891
          %1924 = vst [vmem:[#allocation3 + $0x30] sm:$0xff] %v1892
          %1925 = vst [vmem:[#allocation3 + $0x38] sm:$0xff] %v1893
          %1926 = vst [vmem:[#allocation3 + $0x40] sm:$0xff] %v1894
          %1927 = vst [vmem:[#allocation3 + $0x48] sm:$0xff] %v1895
          %1928 = vst [vmem:[#allocation3 + $0x50] sm:$0xff] %v1896
          %1929 = vst [vmem:[#allocation3 + $0x58] sm:$0xff] %v1897
          %1930 = vst [vmem:[#allocation3 + $0x60] sm:$0xff] %v1898
          %1931 = vst [vmem:[#allocation3 + $0x68] sm:$0xff] %v1899
          %1932 = vst [vmem:[#allocation3 + $0x70] sm:$0xff] %v1900
          %1933 = vst [vmem:[#allocation3 + $0x78] sm:$0xff] %v1901
          %1934 = vst [vmem:[#allocation3 + $0x80] sm:$0xff] %v1902
          %1935 = vst [vmem:[#allocation3 + $0x88] sm:$0xff] %v1903
          %1936 = vst [vmem:[#allocation3 + $0x90] sm:$0xff] %v1904
          %1937 = vst [vmem:[#allocation3 + $0x98] sm:$0xff] %v1905
          %1938 = vst [vmem:[#allocation3 + $0xa0] sm:$0xff] %v1906
          %1939 = vst [vmem:[#allocation3 + $0xa8] sm:$0xff] %v1907
          %1940 = vst [vmem:[#allocation3 + $0xb0] sm:$0xff] %v1908
          %1941 = vst [vmem:[#allocation3 + $0xb8] sm:$0xff] %v1909
          %1942 = vst [vmem:[#allocation3 + $0xc0] sm:$0xff] %v1910
          %1943 = vst [vmem:[#allocation3 + $0xc8] sm:$0xff] %v1911
          %1944 = vst [vmem:[#allocation3 + $0xd0] sm:$0xff] %v1912
          %1945 = vst [vmem:[#allocation3 + $0xd8] sm:$0xff] %v1913
          %1946 = vst [vmem:[#allocation3 + $0xe0] sm:$0xff] %v1914
          %1947 = vst [vmem:[#allocation3 + $0xe8] sm:$0xff] %v1915
          %1948 = vst [vmem:[#allocation3 + $0xf0] sm:$0xff] %v1916
          %1949 = vst [vmem:[#allocation3 + $0xf8] sm:$0xff] %v1917
        $region64: #{tpu_custom_call.1} parent=23 // pred_fallthru
          _
        // Predicated region
        $region65: #{tpu_custom_call.1} parent=23 // pred_check
          %p1950 = pneg %p81
        $region66: #{tpu_custom_call.1} parent=23 // pred_check_branch
          %1952 = sbr.rel (%p1950) target = $region68
        $region67: #{tpu_custom_call.1} parent=23 // pred_region
          %s1954 = ssub.s32 8192, 8192
          %1955 = vsyncadd [#allocation10], %s1954
          %s1956 = sshll.u32 [#allocation11], 4
          %s1957 = int_to_ptr.vmem [resolvable:$true] %s1956
          %1962 = dma.vmem_to_hbm [thread:$0]  %s1957, 8192, %s3, [#allocation10], 128, 128, 8
        $region68: #{tpu_custom_call.1} parent=23 // pred_fallthru
          _
        // Predicated region
        $region69: #{tpu_custom_call.1} parent=23 // pred_check
          %p1963 = pneg %p102
        $region70: #{tpu_custom_call.1} parent=23 // pred_check_branch
          %1965 = sbr.rel (%p1963) target = $region72
        $region71: #{tpu_custom_call.1} parent=23 // pred_region
          %s1967 = ssub.s32 8192, 8192
          %1968 = vsyncadd [#allocation13], %s1967
          %s1969 = sshll.u32 [#allocation12], 4
          %s1970 = int_to_ptr.vmem [resolvable:$true] %s1969
          %1975 = dma.vmem_to_hbm [thread:$0]  %s1970, 8192, %s4, [#allocation13], 128, 128, 8
        $region72: #{tpu_custom_call.1} parent=23 // pred_fallthru
          _
        // Predicated region
        $region73: #{tpu_custom_call.1} parent=23 // pred_check
          %p1976 = pneg %p81
        $region74: #{tpu_custom_call.1} parent=23 // pred_check_branch
          %1978 = sbr.rel (%p1976) target = $region76
        $region75: #{tpu_custom_call.1} parent=23 // pred_region
          %1979 = dma.done [#allocation10], 8192
        $region76: #{tpu_custom_call.1} parent=23 // pred_fallthru
          _
        // Predicated region
        $region77: #{tpu_custom_call.1} parent=23 // pred_check
          %p1980 = pneg %p102
        $region78: #{tpu_custom_call.1} parent=23 // pred_check_branch
          %1982 = sbr.rel (%p1980) target = $region80
        $region79: #{tpu_custom_call.1} parent=23 // pred_region
          %1983 = dma.done [#allocation13], 8192
        $region80: #{tpu_custom_call.1} parent=23 // pred_fallthru
          _
      $region24: #{tpu_custom_call.1} parent=5 // pred_fallthru
        _
      %p1984 = scmp.le.s32.totalorder 2, %s16
      // Predicated region
      $region81: #{tpu_custom_call.1} parent=5 // pred_check
        %p1985 = pneg %p1984
      $region82: #{tpu_custom_call.1} parent=5 // pred_check_branch
        %1987 = sbr.rel (%p1985) target = $region84
      $region83: #{tpu_custom_call.1} parent=5 // pred_region
        %s1988 = ssub.s32 %s16, 2
      $region84: #{tpu_custom_call.1} parent=5 // pred_fallthru
        _
    $region6: #{tpu_custom_call.1} parent=1 // loop_footer
      %s20 = sadd.s32 1, %s16
    $region7: #{tpu_custom_call.1} parent=1 // loop_footer_branch
      %15 = sbr.rel target = $region3
    $region8: #{tpu_custom_call.1} parent=1 // loop_exit
      _
    %1989 = vsyncpa [#allocation9], 1
    %s1990 = scalar_lea.sflag [#allocation9], 1
    %1991 = vsyncpa %s1990, 1
    %1992 = vsyncpa [#allocation10], 1
    %s1993 = scalar_lea.sflag [#allocation10], 1
    %1994 = vsyncpa %s1993, 1
    %1995 = vsyncpa [#allocation13], 1
  %1996 = vsyncmov [#allocation7]
  %s1997 = vpop.sfrf %1996
  %p1998 = scmp.eq.s32.totalorder %s1997, 0
  %p1999 = pneg %p1998
  %2001 = shalt.err (%p1999)

</llo_original>
